<compile_context>
chip_gen: v7x
topology: tpu7x:2x2x1
jax: 0.10.0
libtpu: 0.0.40
codegen_flags: <defaults>
</compile_context>

<pallas_src>
import functools

import jax
import jax.numpy as jnp
from jax import lax
from jax.experimental import pallas as pl
from jax.experimental.pallas import tpu as pltpu

EPS = 1e-5        # nn.InstanceNorm3d default
NEG_SLOPE = 0.2   # LeakyReLU negative_slope


def _fold_upsample_weights(weight):
    """Fold nearest-x2 upsample into the conv taps and split out the ow axis.

    weight: (Cout, Cin, 3, 3, 3)  ->  (3[ow], 8*Cout, 9*Cin)
    Rows of the stacked weight are ordered (pd, ph, pw, cout); the remaining contraction axis is
    ordered (od, oh, cin) to match the 9-tap im2col.  Even output phase uses taps (k0, k1+k2, 0),
    odd phase uses (0, k0+k1, k2) on the original-resolution grid.
    """
    cout, cin = weight.shape[:2]
    g = jnp.array(
        [[[1.0, 0.0, 0.0], [0.0, 1.0, 1.0], [0.0, 0.0, 0.0]],
         [[0.0, 0.0, 0.0], [1.0, 1.0, 0.0], [0.0, 0.0, 1.0]]],
        jnp.float32,
    )
    wf = jnp.einsum("aok,bpl,cqm,uiklm->abcuopqi", g, g, g, weight.astype(jnp.float32))
    wf = wf.reshape(8 * cout, 3, 3, 3, cin)                  # rows (pd,ph,pw,c); (od,oh,ow,ci)
    wf = jnp.transpose(wf, (3, 0, 1, 2, 4)).reshape(3, 8 * cout, 9 * cin)
    return wf


def _im2col9(x, tile_d, dtype):
    """x: (N, Cin, D, H, W) -> (N, nT, 9*Cin, TD*H*W); taps over (od, oh) only, zero-padded in d,h.

    Columns are ordered (d, h, w).  The 3 ow taps are synthesized in-kernel with lane shifts, so
    the materialized HBM stream is 3x smaller than a full 27-tap im2col.
    """
    n, cin, d, h, w = x.shape
    nt = d // tile_d
    xp = jnp.pad(x.astype(dtype), ((0, 0), (0, 0), (1, 1), (1, 1), (0, 0)))
    taps = []
    for od in range(3):
        for oh in range(3):
            taps.append(xp[:, :, od:od + d, oh:oh + h, :])
    xt = jnp.stack(taps, axis=1)                             # (N, 9, Cin, D, H, W)
    xt = xt.reshape(n, 9 * cin, nt, tile_d, h, w)
    xt = jnp.transpose(xt, (0, 2, 1, 3, 4, 5))               # (N, nT, K9, TD, H, W)
    return xt.reshape(n, nt, 9 * cin, tile_d * h * w)


def _interleave_matrix(h, w, dtype):
    """(4*H*W, 4*H*W) 0/1 permutation taking lane order (ph, pw, h, w) -> (h, ph, w, pw)."""
    hw = h * w
    src = jnp.arange(4 * hw)
    ph = src // (2 * hw)
    pw = (src // hw) % 2
    hh = (src % hw) // w
    ww = src % w
    dst = hh * (4 * w) + ph * (2 * w) + ww * 2 + pw
    q = jnp.zeros((4 * hw, 4 * hw), jnp.float32).at[src, dst].set(1.0)
    return q.astype(dtype)


def _plan_tiles(d, h, w, cin, cout, vmem_limit, tile_d=None):
    """Pick the largest fitting d-tile and decide whether the conv cache fits in VMEM."""
    hw = h * w
    k9 = 9 * cin
    budget = int(vmem_limit * 0.85)
    fixed = 2 * (3 * 8 * cout * k9 * 2) + 2 * (4 * hw) * (4 * hw) * 2   # weights + perm matrix
    cache_bytes = 8 * cout * d * hw * 2                                  # bf16 per-sample conv

    def step_bytes(td):
        mt = td * hw
        return (2 * (k9 * mt * 2)            # bf16 im2col block, double-buffered
                + 2 * (8 * cout * mt * 4)    # f32 output block, double-buffered
                + 3 * (8 * cout * mt * 4))   # conv / permute temporaries + spill headroom

    cands = [td for td in range(1, d + 1)
             if d % td == 0 and ((2 * td) % 8 == 0 or td == d)]
    if tile_d is None:
        tile_d = cands[0]
        for td in cands:
            if fixed + step_bytes(td) <= budget:
                tile_d = td
    cache_conv = fixed + step_bytes(tile_d) + cache_bytes <= budget
    return tile_d, cache_conv


def _make_kernel(td, h, w, cin, cout, n_voxels, cache_conv):
    hw = h * w
    mt = td * hw
    k9 = 9 * cin
    inv_cnt = 1.0 / float(n_voxels)

    def conv_tile(x9_ref, w3_ref):
        """Conv(upsample(x)) for this D-tile, all 8 phases stacked: (8*Cout, Mt) f32."""
        x9 = x9_ref[...]                                   # (9*Cin, Mt) bf16, cols (d, h, w)
        zcol = jnp.zeros((k9, 1), x9.dtype)
        x_prev = jnp.concatenate([zcol, x9[:, :mt - 1]], axis=1)   # col j <- col j-1
        x_next = jnp.concatenate([x9[:, 1:], zcol], axis=1)        # col j <- col j+1
        wpos = lax.broadcasted_iota(jnp.int32, (1, mt), 1) % w
        x_prev = jnp.where(wpos == 0, 0.0, x_prev)         # zero the w-boundary wrap-ins
        x_next = jnp.where(wpos == w - 1, 0.0, x_next)
        y = jnp.dot(w3_ref[0], x_prev, preferred_element_type=jnp.float32)
        y = y + jnp.dot(w3_ref[1], x9, preferred_element_type=jnp.float32)
        y = y + jnp.dot(w3_ref[2], x_next, preferred_element_type=jnp.float32)
        return y                                           # rows ordered (pd, ph, pw, c)

    def kernel(x9_ref, w3_ref, q_ref, o_ref,
               sum_ref, ssq_ref, mean_ref, rstd_ref, *cache_ref):
        p = pl.program_id(1)
        t = pl.program_id(2)

        @pl.when((p == 0) & (t == 0))
        def _init():
            sum_ref[...] = jnp.zeros_like(sum_ref)
            ssq_ref[...] = jnp.zeros_like(ssq_ref)

        @pl.when(p == 0)
        def _pass0():
            y = conv_tile(x9_ref, w3_ref)                  # (8*Cout, Mt) f32
            sum_ref[...] = sum_ref[...] + y.sum(axis=1, keepdims=True)
            ssq_ref[...] = ssq_ref[...] + (y * y).sum(axis=1, keepdims=True)
            if cache_conv:
                cache_ref[0][t] = y.astype(jnp.bfloat16)   # per-sample conv cache (VMEM)

        @pl.when((p == 1) & (t == 0))
        def _finalize():
            s = sum_ref[...].reshape(8, cout, 1).sum(axis=0)
            q = ssq_ref[...].reshape(8, cout, 1).sum(axis=0)
            mean = s * inv_cnt
            # TODO(synk): single-pass E[y^2]-E[y]^2 in f32; a centered second pass over the
            # cached conv would be more robust for data with a large per-channel DC component.
            var = jnp.maximum(q * inv_cnt - mean * mean, 0.0)
            mean_ref[...] = mean
            rstd_ref[...] = lax.rsqrt(var + EPS)

        @pl.when(p == 1)
        def _pass1():
            if cache_conv:
                y32 = cache_ref[0][t].astype(jnp.float32)  # pure normalize+store pass
            else:
                y32 = conv_tile(x9_ref, w3_ref)            # cache did not fit VMEM: recompute
            # Assemble A: rows (d, pd, c), lanes (ph, pw, h, w); aligned 8-row / hw-lane slices.
            rows = []
            for d_loc in range(td):
                zd = y32[:, d_loc * hw:(d_loc + 1) * hw]   # (8*Cout, hw)
                for pd in range(2):
                    segs = [zd[((pd * 2 + ph) * 2 + pw) * cout:
                               ((pd * 2 + ph) * 2 + pw + 1) * cout, :]
                            for ph in range(2) for pw in range(2)]
                    rows.append(jnp.concatenate(segs, axis=-1))      # (Cout, 4*hw)
            a = jnp.concatenate(rows, axis=0).astype(jnp.bfloat16)   # (2*TD*Cout, 4*hw)
            # (h, ph, w, pw) lane interleave on the MXU (bf16 operands, f32 accumulation).
            r = jnp.dot(a, q_ref[...], preferred_element_type=jnp.float32)
            mean_r = jnp.concatenate([mean_ref[...]] * (2 * td), axis=0)   # per-row = per-channel
            rstd_r = jnp.concatenate([rstd_ref[...]] * (2 * td), axis=0)
            r = (r - mean_r) * rstd_r                      # InstanceNorm (no affine)
            # TODO(synk): Dropout(p=0.3) is applied as identity (inference/eval semantics).
            r = jnp.where(r > 0, r, NEG_SLOPE * r)         # LeakyReLU(0.2)
            for i in range(2 * td):                        # i = 2*d_local + pd
                o_ref[:, i, :] = r[i * cout:(i + 1) * cout, :].astype(o_ref.dtype)

    return kernel


def hr_skip_forward(x, weight, bias=None, *, tile_d=None, act_dtype=jnp.bfloat16):
    """x: (N, Cin, D, H, W) f32; weight: (Cout, Cin, 3, 3, 3).

    `bias` is accepted for API parity but unused: a per-channel constant added before
    InstanceNorm3d (affine=False) cancels exactly in (y - mean) * rstd.
    """
    n, cin, d, h, w = x.shape
    cout = weight.shape[0]
    d2, hw2 = 2 * d, 4 * h * w
    k9 = 9 * cin

    try:
        vmem_cap = int(pltpu.get_tpu_info().vmem_capacity_bytes)
    except Exception:
        vmem_cap = 64 * 1024 * 1024        # conservative (v7x per-core)
    vmem_limit = min(vmem_cap * 3 // 4, 100 * 1024 * 1024)

    tile_d, cache_conv = _plan_tiles(d, h, w, cin, cout, vmem_limit, tile_d)
    assert d % tile_d == 0 and ((2 * tile_d) % 8 == 0 or tile_d == d), (d, tile_d)
    nt = d // tile_d
    mt = tile_d * h * w

    x9 = _im2col9(x, tile_d, act_dtype)                     # (N, nT, 9*Cin, Mt)
    w3 = _fold_upsample_weights(weight).astype(act_dtype)   # (3, 8*Cout, 9*Cin)
    qmat = _interleave_matrix(h, w, act_dtype)              # (4*H*W, 4*H*W)

    kernel = _make_kernel(tile_d, h, w, cin, cout, 8 * d * h * w, cache_conv)

    def x9_index(gn, gp, gt):
        # Pass 0 walks the D-tiles.  When the conv is cached in VMEM, pass 1 parks on the last
        # block (no refetch of the im2col stream); otherwise it walks the tiles again.
        if cache_conv:
            return (gn, gt * (1 - gp) + (nt - 1) * gp, 0, 0)
        return (gn, gt, 0, 0)

    scratch = [
        pltpu.VMEM((8 * cout, 1), jnp.float32),   # running per-(phase, channel) sum
        pltpu.VMEM((8 * cout, 1), jnp.float32),   # running per-(phase, channel) sum of squares
        pltpu.VMEM((cout, 1), jnp.float32),       # per-channel mean
        pltpu.VMEM((cout, 1), jnp.float32),       # per-channel rsqrt(var + eps)
    ]
    if cache_conv:
        scratch.append(pltpu.VMEM((nt, 8 * cout, mt), jnp.bfloat16))   # per-sample conv cache

    # Output declared as (N, Cout, D2, H2*W2): memory order == NCDHW at 2x resolution, so the
    # final conversion is a free reshape; the block's last dim (4*H*W) is lane-dense.
    out = pl.pallas_call(
        kernel,
        out_shape=jax.ShapeDtypeStruct((n, cout, d2, hw2), jnp.float32),
        grid=(n, 2, nt),                                    # (sample, pass, d-tile)
        in_specs=[
            pl.BlockSpec((None, None, k9, mt), x9_index),
            pl.BlockSpec((3, 8 * cout, k9), lambda gn, gp, gt: (0, 0, 0)),
            pl.BlockSpec((4 * h * w, 4 * h * w), lambda gn, gp, gt: (0, 0)),
        ],
        out_specs=pl.BlockSpec(
            (None, cout, 2 * tile_d, hw2),
            # pass 0 parks the (never-written) output window on block 0; pass 1 walks the tiles
            # and fully overwrites each block before it is written back.
            lambda gn, gp, gt: (gn, 0, gt * gp, 0),
        ),
        scratch_shapes=scratch,
        compiler_params=pltpu.CompilerParams(
            # TODO(synk): on v7x (2 TensorCores) only the N axis is sharded; N==1 workloads would
            # need the D-tiles split across cores plus a small cross-core stats reduction.
            dimension_semantics=("parallel", "arbitrary", "arbitrary"),
            vmem_limit_bytes=vmem_limit,
        ),
    )(x9, w3, qmat)

    return out.reshape(n, cout, d2, 2 * h, 2 * w)


def hr_skip_reference(x, weight, bias):
    """Pure-JAX f32 reference (same semantics as the PyTorch module in eval mode)."""
    x = jnp.repeat(jnp.repeat(jnp.repeat(x, 2, axis=2), 2, axis=3), 2, axis=4)
    y = lax.conv_general_dilated(
        x, weight, window_strides=(1, 1, 1), padding=[(1, 1)] * 3,
        dimension_numbers=("NCDHW", "OIDHW", "NCDHW"),
    ) + bias.reshape(1, -1, 1, 1, 1)
    mean = jnp.mean(y, axis=(2, 3, 4), keepdims=True)
    var = jnp.mean((y - mean) ** 2, axis=(2, 3, 4), keepdims=True)
    y = (y - mean) * lax.rsqrt(var + EPS)
    return jnp.where(y > 0, y, NEG_SLOPE * y)


if __name__ == "__main__":
    N, Cin, Cout = 2, 4, 8
    D = H = W = 8          # upsampled to 16^3 inside the forward

    key = jax.random.PRNGKey(0)
    kx, kw, kb = jax.random.split(key, 3)
    x = jax.random.normal(kx, (N, Cin, D, H, W), jnp.float32)
    weight = jax.random.normal(kw, (Cout, Cin, 3, 3, 3), jnp.float32) * 0.1
    bias = jax.random.normal(kb, (Cout,), jnp.float32) * 0.1

    fwd = jax.jit(functools.partial(hr_skip_forward, tile_d=4))  # tile_d=4 -> 2 D-tiles/sample
    out = jax.block_until_ready(fwd(x, weight, bias))
    ref = jax.block_until_ready(hr_skip_reference(x, weight, bias))

    assert out.shape == (N, Cout, 2 * D, 2 * H, 2 * W), out.shape
    # Kernel uses bf16 activations/weights (f32 accumulation); reference is pure f32.
    assert jnp.allclose(out, ref, rtol=4e-2, atol=4e-2), float(jnp.max(jnp.abs(out - ref)))
    print("KERNEL_OK")
</pallas_src>

<mosaic_0001>
module attributes {stable_mosaic.version = 11 : i64} {
  func.func @kernel(%arg0: i32, %arg1: i32, %arg2: i32, %arg3: memref<1x1x36x256xbf16, #tpu.memory_space<vmem>>, %arg4: memref<3x64x36xbf16, #tpu.memory_space<vmem>>, %arg5: memref<256x256xbf16, #tpu.memory_space<vmem>>, %arg6: memref<1x8x8x256xf32, #tpu.memory_space<vmem>>, %arg7: memref<64x1xf32, #tpu.memory_space<vmem>>, %arg8: memref<64x1xf32, #tpu.memory_space<vmem>>, %arg9: memref<8x1xf32, #tpu.memory_space<vmem>>, %arg10: memref<8x1xf32, #tpu.memory_space<vmem>>, %arg11: memref<2x64x256xbf16, #tpu.memory_space<vmem>>) attributes {dimension_semantics = [#tpu.dimension_semantics<parallel>, #tpu.dimension_semantics<arbitrary>, #tpu.dimension_semantics<arbitrary>], iteration_bounds = array<i64: 2, 2, 2>, scalar_prefetch = 0 : i64, scratch_operands = 5 : i64, tpu.core_type = #tpu.core_type<tc>, window_params = [{transform_indices = @transform_0, window_bounds = array<i64: 1, 1, 36, 256>}, {pipeline_mode = #tpu.pipeline_mode<synchronous>, transform_indices = @transform_1, window_bounds = array<i64: 3, 64, 36>}, {pipeline_mode = #tpu.pipeline_mode<synchronous>, transform_indices = @transform_2, window_bounds = array<i64: 256, 256>}, {transform_indices = @transform_3, window_bounds = array<i64: 1, 8, 8, 256>}]} {
    %c0_i32 = arith.constant 0 : i32
    %0 = arith.cmpi eq, %arg1, %c0_i32 : i32
    %c0_i32_0 = arith.constant 0 : i32
    %1 = arith.cmpi eq, %arg2, %c0_i32_0 : i32
    %2 = arith.andi %0, %1 : i1
    %3 = arith.extui %2 : i1 to i32
    %c0_i32_1 = arith.constant 0 : i32
    %4 = arith.cmpi ne, %3, %c0_i32_1 : i32
    scf.if %4 {
      %cst = arith.constant 0.000000e+00 : f32
      %16 = vector.broadcast %cst : f32 to vector<64x1xf32>
      %c0 = arith.constant 0 : index
      %c0_8 = arith.constant 0 : index
      %17 = vector.load %arg7[%c0, %c0_8] : memref<64x1xf32, #tpu.memory_space<vmem>>, vector<64x1xf32>
      tpu.vector_store %arg7[%c0, %c0_8], %16 {strides = array<i32>} : memref<64x1xf32, #tpu.memory_space<vmem>>, vector<64x1xf32>,
      %cst_9 = arith.constant 0.000000e+00 : f32
      %18 = vector.broadcast %cst_9 : f32 to vector<64x1xf32>
      %c0_10 = arith.constant 0 : index
      %c0_11 = arith.constant 0 : index
      %19 = vector.load %arg8[%c0_10, %c0_11] : memref<64x1xf32, #tpu.memory_space<vmem>>, vector<64x1xf32>
      tpu.vector_store %arg8[%c0_10, %c0_11], %18 {strides = array<i32>} : memref<64x1xf32, #tpu.memory_space<vmem>>, vector<64x1xf32>,
    } else {
    }
    %c0_i32_2 = arith.constant 0 : i32
    %5 = arith.cmpi eq, %arg1, %c0_i32_2 : i32
    %6 = arith.extui %5 : i1 to i32
    %c0_i32_3 = arith.constant 0 : i32
    %7 = arith.cmpi ne, %6, %c0_i32_3 : i32
    scf.if %7 {
      %c0 = arith.constant 0 : index
      %c0_8 = arith.constant 0 : index
      %c0_9 = arith.constant 0 : index
      %c0_10 = arith.constant 0 : index
      %16 = vector.load %arg3[%c0, %c0_8, %c0_9, %c0_10] : memref<1x1x36x256xbf16, #tpu.memory_space<vmem>>, vector<1x1x36x256xbf16>
      %17 = vector.shape_cast %16 : vector<1x1x36x256xbf16> to vector<36x256xbf16>
      %cst = arith.constant 0.000000e+00 : bf16
      %18 = vector.broadcast %cst : bf16 to vector<36x1xbf16>
      %19 = vector.extract_strided_slice %17 {offsets = [0, 0], sizes = [36, 255], strides = [1, 1]} : vector<36x256xbf16> to vector<36x255xbf16>
      %20 = tpu.concatenate %18, %19 in 1 : vector<36x1xbf16>, vector<36x255xbf16> -> vector<36x256xbf16>
      %21 = vector.extract_strided_slice %17 {offsets = [0, 1], sizes = [36, 255], strides = [1, 1]} : vector<36x256xbf16> to vector<36x255xbf16>
      %22 = tpu.concatenate %21, %18 in 1 : vector<36x255xbf16>, vector<36x1xbf16> -> vector<36x256xbf16>
      %23 = tpu.iota {dimensions = array<i32: 1>} : vector<1x256xi32>
      %c8_i32 = arith.constant 8 : i32
      %c0_i32_11 = arith.constant 0 : i32
      %24 = arith.cmpi eq, %c8_i32, %c0_i32_11 : i32
      %c1_i32_12 = arith.constant 1 : i32
      %25 = arith.select %24, %c1_i32_12, %c8_i32 : i32
      %26 = vector.broadcast %25 : i32 to vector<1x256xi32>
      %27 = arith.remsi %23, %26 : vector<1x256xi32>
      %c0_i32_13 = arith.constant 0 : i32
      %28 = vector.broadcast %c0_i32_13 : i32 to vector<1x256xi32>
      %29 = arith.cmpi ne, %27, %28 : vector<1x256xi32>
      %c0_i32_14 = arith.constant 0 : i32
      %30 = vector.broadcast %c0_i32_14 : i32 to vector<1x256xi32>
      %31 = arith.cmpi slt, %27, %30 : vector<1x256xi32>
      %c0_i32_15 = arith.constant 0 : i32
      %32 = arith.cmpi slt, %25, %c0_i32_15 : i32
      %33 = vector.broadcast %32 : i1 to vector<1x256xi1>
      %34 = vector.broadcast %33 : vector<1x256xi1> to vector<1x256xi1>
      %35 = arith.xori %31, %34 : vector<1x256xi1>
      %36 = arith.andi %35, %29 : vector<1x256xi1>
      %37 = vector.broadcast %25 : i32 to vector<1x256xi32>
      %38 = arith.addi %27, %37 : vector<1x256xi32>
      %39 = arith.select %36, %38, %27 : vector<1x256xi1>, vector<1x256xi32>
      %c0_i32_16 = arith.constant 0 : i32
      %40 = vector.broadcast %c0_i32_16 : i32 to vector<1x256xi32>
      %41 = arith.cmpi eq, %39, %40 : vector<1x256xi32>
      %cst_17 = arith.constant 0.000000e+00 : f32
      %42 = arith.truncf %cst_17 : f32 to bf16
      %43 = vector.shape_cast %41 : vector<1x256xi1> to vector<1x256xi1>
      %44 = vector.broadcast %43 : vector<1x256xi1> to vector<36x256xi1>
      %45 = vector.broadcast %42 : bf16 to vector<36x256xbf16>
      %46 = arith.select %44, %45, %20 : vector<36x256xi1>, vector<36x256xbf16>
      %c7_i32 = arith.constant 7 : i32
      %47 = vector.broadcast %c7_i32 : i32 to vector<1x256xi32>
      %48 = arith.cmpi eq, %39, %47 : vector<1x256xi32>
      %cst_18 = arith.constant 0.000000e+00 : f32
      %49 = arith.truncf %cst_18 : f32 to bf16
      %50 = vector.shape_cast %48 : vector<1x256xi1> to vector<1x256xi1>
      %51 = vector.broadcast %50 : vector<1x256xi1> to vector<36x256xi1>
      %52 = vector.broadcast %49 : bf16 to vector<36x256xbf16>
      %53 = arith.select %51, %52, %22 : vector<36x256xi1>, vector<36x256xbf16>
      %c0_19 = arith.constant 0 : index
      %c0_20 = arith.constant 0 : index
      %c0_21 = arith.constant 0 : index
      %54 = vector.load %arg4[%c0_19, %c0_20, %c0_21] : memref<3x64x36xbf16, #tpu.memory_space<vmem>>, vector<1x64x36xbf16>
      %55 = vector.shape_cast %54 : vector<1x64x36xbf16> to vector<64x36xbf16>
      %cst_22 = arith.constant dense<0.000000e+00> : vector<64x256xf32>
      %56 = tpu.matmul %55, %46, %cst_22 {dimension_numbers = #tpu.dot_dimension_numbers<[1], [0], [0], [1], [0, 0, 1, 1], [], []>} : vector<64x36xbf16>, vector<36x256xbf16>, vector<64x256xf32> -> vector<64x256xf32>
      %c1 = arith.constant 1 : index
      %c0_23 = arith.constant 0 : index
      %c0_24 = arith.constant 0 : index
      %57 = vector.load %arg4[%c1, %c0_23, %c0_24] : memref<3x64x36xbf16, #tpu.memory_space<vmem>>, vector<1x64x36xbf16>
      %58 = vector.shape_cast %57 : vector<1x64x36xbf16> to vector<64x36xbf16>
      %cst_25 = arith.constant dense<0.000000e+00> : vector<64x256xf32>
      %59 = tpu.matmul %58, %17, %cst_25 {dimension_numbers = #tpu.dot_dimension_numbers<[1], [0], [0], [1], [0, 0, 1, 1], [], []>} : vector<64x36xbf16>, vector<36x256xbf16>, vector<64x256xf32> -> vector<64x256xf32>
      %60 = arith.addf %56, %59 : vector<64x256xf32>
      %c2 = arith.constant 2 : index
      %c0_26 = arith.constant 0 : index
      %c0_27 = arith.constant 0 : index
      %61 = vector.load %arg4[%c2, %c0_26, %c0_27] : memref<3x64x36xbf16, #tpu.memory_space<vmem>>, vector<1x64x36xbf16>
      %62 = vector.shape_cast %61 : vector<1x64x36xbf16> to vector<64x36xbf16>
      %cst_28 = arith.constant dense<0.000000e+00> : vector<64x256xf32>
      %63 = tpu.matmul %62, %53, %cst_28 {dimension_numbers = #tpu.dot_dimension_numbers<[1], [0], [0], [1], [0, 0, 1, 1], [], []>} : vector<64x36xbf16>, vector<36x256xbf16>, vector<64x256xf32> -> vector<64x256xf32>
      %64 = arith.addf %60, %63 : vector<64x256xf32>
      %c0_29 = arith.constant 0 : index
      %c0_30 = arith.constant 0 : index
      %65 = vector.load %arg7[%c0_29, %c0_30] : memref<64x1xf32, #tpu.memory_space<vmem>>, vector<64x1xf32>
      %cst_31 = arith.constant dense<0.000000e+00> : vector<64xf32>
      %66 = vector.multi_reduction <add>, %64, %cst_31 [1] : vector<64x256xf32> to vector<64xf32>
      %67 = vector.shape_cast %66 : vector<64xf32> to vector<64x1xf32>
      %68 = arith.addf %65, %67 : vector<64x1xf32>
      %c0_32 = arith.constant 0 : index
      %c0_33 = arith.constant 0 : index
      %69 = vector.load %arg7[%c0_32, %c0_33] : memref<64x1xf32, #tpu.memory_space<vmem>>, vector<64x1xf32>
      tpu.vector_store %arg7[%c0_32, %c0_33], %68 {strides = array<i32>} : memref<64x1xf32, #tpu.memory_space<vmem>>, vector<64x1xf32>,
      %c0_34 = arith.constant 0 : index
      %c0_35 = arith.constant 0 : index
      %70 = vector.load %arg8[%c0_34, %c0_35] : memref<64x1xf32, #tpu.memory_space<vmem>>, vector<64x1xf32>
      %71 = arith.mulf %64, %64 : vector<64x256xf32>
      %cst_36 = arith.constant dense<0.000000e+00> : vector<64xf32>
      %72 = vector.multi_reduction <add>, %71, %cst_36 [1] : vector<64x256xf32> to vector<64xf32>
      %73 = vector.shape_cast %72 : vector<64xf32> to vector<64x1xf32>
      %74 = arith.addf %70, %73 : vector<64x1xf32>
      %c0_37 = arith.constant 0 : index
      %c0_38 = arith.constant 0 : index
      %75 = vector.load %arg8[%c0_37, %c0_38] : memref<64x1xf32, #tpu.memory_space<vmem>>, vector<64x1xf32>
      tpu.vector_store %arg8[%c0_37, %c0_38], %74 {strides = array<i32>} : memref<64x1xf32, #tpu.memory_space<vmem>>, vector<64x1xf32>,
      %76 = arith.truncf %64 : vector<64x256xf32> to vector<64x256xbf16>
      %77 = arith.index_cast %arg2 : i32 to index
      %c0_39 = arith.constant 0 : index
      %c0_40 = arith.constant 0 : index
      %78 = vector.load %arg11[%77, %c0_39, %c0_40] : memref<2x64x256xbf16, #tpu.memory_space<vmem>>, vector<1x64x256xbf16>
      %79 = vector.shape_cast %78 : vector<1x64x256xbf16> to vector<64x256xbf16>
      %80 = vector.shape_cast %76 : vector<64x256xbf16> to vector<1x64x256xbf16>
      tpu.vector_store %arg11[%77, %c0_39, %c0_40], %80 {strides = array<i32>} : memref<2x64x256xbf16, #tpu.memory_space<vmem>>, vector<1x64x256xbf16>,
    } else {
    }
    %c1_i32 = arith.constant 1 : i32
    %8 = arith.cmpi eq, %arg1, %c1_i32 : i32
    %c0_i32_4 = arith.constant 0 : i32
    %9 = arith.cmpi eq, %arg2, %c0_i32_4 : i32
    %10 = arith.andi %8, %9 : i1
    %11 = arith.extui %10 : i1 to i32
    %c0_i32_5 = arith.constant 0 : i32
    %12 = arith.cmpi ne, %11, %c0_i32_5 : i32
    scf.if %12 {
      %c0 = arith.constant 0 : index
      %c0_8 = arith.constant 0 : index
      %16 = vector.load %arg7[%c0, %c0_8] : memref<64x1xf32, #tpu.memory_space<vmem>>, vector<64x1xf32>
      %17 = vector.shape_cast %16 : vector<64x1xf32> to vector<8x8x1xf32>
      %cst = arith.constant dense<0.000000e+00> : vector<8x1xf32>
      %18 = vector.multi_reduction <add>, %17, %cst [0] : vector<8x8x1xf32> to vector<8x1xf32>
      %c0_9 = arith.constant 0 : index
      %c0_10 = arith.constant 0 : index
      %19 = vector.load %arg8[%c0_9, %c0_10] : memref<64x1xf32, #tpu.memory_space<vmem>>, vector<64x1xf32>
      %20 = vector.shape_cast %19 : vector<64x1xf32> to vector<8x8x1xf32>
      %cst_11 = arith.constant dense<0.000000e+00> : vector<8x1xf32>
      %21 = vector.multi_reduction <add>, %20, %cst_11 [0] : vector<8x8x1xf32> to vector<8x1xf32>
      %cst_12 = arith.constant 2.44140625E-4 : f32
      %22 = vector.broadcast %cst_12 : f32 to vector<8x1xf32>
      %23 = arith.mulf %18, %22 : vector<8x1xf32>
      %cst_13 = arith.constant 2.44140625E-4 : f32
      %24 = vector.broadcast %cst_13 : f32 to vector<8x1xf32>
      %25 = arith.mulf %21, %24 : vector<8x1xf32>
      %26 = arith.mulf %23, %23 : vector<8x1xf32>
      %27 = arith.subf %25, %26 : vector<8x1xf32>
      %cst_14 = arith.constant 0.000000e+00 : f32
      %28 = vector.broadcast %cst_14 : f32 to vector<8x1xf32>
      %29 = arith.maximumf %27, %28 : vector<8x1xf32>
      %c0_15 = arith.constant 0 : index
      %c0_16 = arith.constant 0 : index
      %30 = vector.load %arg9[%c0_15, %c0_16] : memref<8x1xf32, #tpu.memory_space<vmem>>, vector<8x1xf32>
      tpu.vector_store %arg9[%c0_15, %c0_16], %23 {strides = array<i32>} : memref<8x1xf32, #tpu.memory_space<vmem>>, vector<8x1xf32>,
      %cst_17 = arith.constant 9.99999974E-6 : f32
      %31 = vector.broadcast %cst_17 : f32 to vector<8x1xf32>
      %32 = arith.addf %29, %31 : vector<8x1xf32>
      %33 = math.rsqrt %32 : vector<8x1xf32>
      %c0_18 = arith.constant 0 : index
      %c0_19 = arith.constant 0 : index
      %34 = vector.load %arg10[%c0_18, %c0_19] : memref<8x1xf32, #tpu.memory_space<vmem>>, vector<8x1xf32>
      tpu.vector_store %arg10[%c0_18, %c0_19], %33 {strides = array<i32>} : memref<8x1xf32, #tpu.memory_space<vmem>>, vector<8x1xf32>,
    } else {
    }
    %c1_i32_6 = arith.constant 1 : i32
    %13 = arith.cmpi eq, %arg1, %c1_i32_6 : i32
    %14 = arith.extui %13 : i1 to i32
    %c0_i32_7 = arith.constant 0 : i32
    %15 = arith.cmpi ne, %14, %c0_i32_7 : i32
    scf.if %15 {
      %16 = arith.index_cast %arg2 : i32 to index
      %c0 = arith.constant 0 : index
      %c0_8 = arith.constant 0 : index
      %17 = vector.load %arg11[%16, %c0, %c0_8] : memref<2x64x256xbf16, #tpu.memory_space<vmem>>, vector<1x64x256xbf16>
      %18 = vector.shape_cast %17 : vector<1x64x256xbf16> to vector<64x256xbf16>
      %19 = arith.extf %18 : vector<64x256xbf16> to vector<64x256xf32>
      %20 = vector.extract_strided_slice %19 {offsets = [0, 0], sizes = [64, 64], strides = [1, 1]} : vector<64x256xf32> to vector<64x64xf32>
      %21 = vector.extract_strided_slice %20 {offsets = [0, 0], sizes = [8, 64], strides = [1, 1]} : vector<64x64xf32> to vector<8x64xf32>
      %22 = vector.extract_strided_slice %20 {offsets = [8, 0], sizes = [8, 64], strides = [1, 1]} : vector<64x64xf32> to vector<8x64xf32>
      %23 = vector.extract_strided_slice %20 {offsets = [16, 0], sizes = [8, 64], strides = [1, 1]} : vector<64x64xf32> to vector<8x64xf32>
      %24 = vector.extract_strided_slice %20 {offsets = [24, 0], sizes = [8, 64], strides = [1, 1]} : vector<64x64xf32> to vector<8x64xf32>
      %25 = tpu.concatenate %21, %22, %23, %24 in 1 : vector<8x64xf32>, vector<8x64xf32>, vector<8x64xf32>, vector<8x64xf32> -> vector<8x256xf32>
      %26 = vector.extract_strided_slice %20 {offsets = [32, 0], sizes = [8, 64], strides = [1, 1]} : vector<64x64xf32> to vector<8x64xf32>
      %27 = vector.extract_strided_slice %20 {offsets = [40, 0], sizes = [8, 64], strides = [1, 1]} : vector<64x64xf32> to vector<8x64xf32>
      %28 = vector.extract_strided_slice %20 {offsets = [48, 0], sizes = [8, 64], strides = [1, 1]} : vector<64x64xf32> to vector<8x64xf32>
      %29 = vector.extract_strided_slice %20 {offsets = [56, 0], sizes = [8, 64], strides = [1, 1]} : vector<64x64xf32> to vector<8x64xf32>
      %30 = tpu.concatenate %26, %27, %28, %29 in 1 : vector<8x64xf32>, vector<8x64xf32>, vector<8x64xf32>, vector<8x64xf32> -> vector<8x256xf32>
      %31 = vector.extract_strided_slice %19 {offsets = [0, 64], sizes = [64, 64], strides = [1, 1]} : vector<64x256xf32> to vector<64x64xf32>
      %32 = vector.extract_strided_slice %31 {offsets = [0, 0], sizes = [8, 64], strides = [1, 1]} : vector<64x64xf32> to vector<8x64xf32>
      %33 = vector.extract_strided_slice %31 {offsets = [8, 0], sizes = [8, 64], strides = [1, 1]} : vector<64x64xf32> to vector<8x64xf32>
      %34 = vector.extract_strided_slice %31 {offsets = [16, 0], sizes = [8, 64], strides = [1, 1]} : vector<64x64xf32> to vector<8x64xf32>
      %35 = vector.extract_strided_slice %31 {offsets = [24, 0], sizes = [8, 64], strides = [1, 1]} : vector<64x64xf32> to vector<8x64xf32>
      %36 = tpu.concatenate %32, %33, %34, %35 in 1 : vector<8x64xf32>, vector<8x64xf32>, vector<8x64xf32>, vector<8x64xf32> -> vector<8x256xf32>
      %37 = vector.extract_strided_slice %31 {offsets = [32, 0], sizes = [8, 64], strides = [1, 1]} : vector<64x64xf32> to vector<8x64xf32>
      %38 = vector.extract_strided_slice %31 {offsets = [40, 0], sizes = [8, 64], strides = [1, 1]} : vector<64x64xf32> to vector<8x64xf32>
      %39 = vector.extract_strided_slice %31 {offsets = [48, 0], sizes = [8, 64], strides = [1, 1]} : vector<64x64xf32> to vector<8x64xf32>
      %40 = vector.extract_strided_slice %31 {offsets = [56, 0], sizes = [8, 64], strides = [1, 1]} : vector<64x64xf32> to vector<8x64xf32>
      %41 = tpu.concatenate %37, %38, %39, %40 in 1 : vector<8x64xf32>, vector<8x64xf32>, vector<8x64xf32>, vector<8x64xf32> -> vector<8x256xf32>
      %42 = vector.extract_strided_slice %19 {offsets = [0, 128], sizes = [64, 64], strides = [1, 1]} : vector<64x256xf32> to vector<64x64xf32>
      %43 = vector.extract_strided_slice %42 {offsets = [0, 0], sizes = [8, 64], strides = [1, 1]} : vector<64x64xf32> to vector<8x64xf32>
      %44 = vector.extract_strided_slice %42 {offsets = [8, 0], sizes = [8, 64], strides = [1, 1]} : vector<64x64xf32> to vector<8x64xf32>
      %45 = vector.extract_strided_slice %42 {offsets = [16, 0], sizes = [8, 64], strides = [1, 1]} : vector<64x64xf32> to vector<8x64xf32>
      %46 = vector.extract_strided_slice %42 {offsets = [24, 0], sizes = [8, 64], strides = [1, 1]} : vector<64x64xf32> to vector<8x64xf32>
      %47 = tpu.concatenate %43, %44, %45, %46 in 1 : vector<8x64xf32>, vector<8x64xf32>, vector<8x64xf32>, vector<8x64xf32> -> vector<8x256xf32>
      %48 = vector.extract_strided_slice %42 {offsets = [32, 0], sizes = [8, 64], strides = [1, 1]} : vector<64x64xf32> to vector<8x64xf32>
      %49 = vector.extract_strided_slice %42 {offsets = [40, 0], sizes = [8, 64], strides = [1, 1]} : vector<64x64xf32> to vector<8x64xf32>
      %50 = vector.extract_strided_slice %42 {offsets = [48, 0], sizes = [8, 64], strides = [1, 1]} : vector<64x64xf32> to vector<8x64xf32>
      %51 = vector.extract_strided_slice %42 {offsets = [56, 0], sizes = [8, 64], strides = [1, 1]} : vector<64x64xf32> to vector<8x64xf32>
      %52 = tpu.concatenate %48, %49, %50, %51 in 1 : vector<8x64xf32>, vector<8x64xf32>, vector<8x64xf32>, vector<8x64xf32> -> vector<8x256xf32>
      %53 = vector.extract_strided_slice %19 {offsets = [0, 192], sizes = [64, 64], strides = [1, 1]} : vector<64x256xf32> to vector<64x64xf32>
      %54 = vector.extract_strided_slice %53 {offsets = [0, 0], sizes = [8, 64], strides = [1, 1]} : vector<64x64xf32> to vector<8x64xf32>
      %55 = vector.extract_strided_slice %53 {offsets = [8, 0], sizes = [8, 64], strides = [1, 1]} : vector<64x64xf32> to vector<8x64xf32>
      %56 = vector.extract_strided_slice %53 {offsets = [16, 0], sizes = [8, 64], strides = [1, 1]} : vector<64x64xf32> to vector<8x64xf32>
      %57 = vector.extract_strided_slice %53 {offsets = [24, 0], sizes = [8, 64], strides = [1, 1]} : vector<64x64xf32> to vector<8x64xf32>
      %58 = tpu.concatenate %54, %55, %56, %57 in 1 : vector<8x64xf32>, vector<8x64xf32>, vector<8x64xf32>, vector<8x64xf32> -> vector<8x256xf32>
      %59 = vector.extract_strided_slice %53 {offsets = [32, 0], sizes = [8, 64], strides = [1, 1]} : vector<64x64xf32> to vector<8x64xf32>
      %60 = vector.extract_strided_slice %53 {offsets = [40, 0], sizes = [8, 64], strides = [1, 1]} : vector<64x64xf32> to vector<8x64xf32>
      %61 = vector.extract_strided_slice %53 {offsets = [48, 0], sizes = [8, 64], strides = [1, 1]} : vector<64x64xf32> to vector<8x64xf32>
      %62 = vector.extract_strided_slice %53 {offsets = [56, 0], sizes = [8, 64], strides = [1, 1]} : vector<64x64xf32> to vector<8x64xf32>
      %63 = tpu.concatenate %59, %60, %61, %62 in 1 : vector<8x64xf32>, vector<8x64xf32>, vector<8x64xf32>, vector<8x64xf32> -> vector<8x256xf32>
      %64 = tpu.concatenate %25, %30, %36, %41, %47, %52, %58, %63 in 0 : vector<8x256xf32>, vector<8x256xf32>, vector<8x256xf32>, vector<8x256xf32>, vector<8x256xf32>, vector<8x256xf32>, vector<8x256xf32>, vector<8x256xf32> -> vector<64x256xf32>
      %65 = arith.truncf %64 : vector<64x256xf32> to vector<64x256xbf16>
      %c0_9 = arith.constant 0 : index
      %c0_10 = arith.constant 0 : index
      %66 = vector.load %arg5[%c0_9, %c0_10] : memref<256x256xbf16, #tpu.memory_space<vmem>>, vector<256x256xbf16>
      %cst = arith.constant dense<0.000000e+00> : vector<64x256xf32>
      %67 = tpu.matmul %65, %66, %cst {dimension_numbers = #tpu.dot_dimension_numbers<[1], [0], [0], [1], [0, 0, 1, 1], [], []>} : vector<64x256xbf16>, vector<256x256xbf16>, vector<64x256xf32> -> vector<64x256xf32>
      %c0_11 = arith.constant 0 : index
      %c0_12 = arith.constant 0 : index
      %68 = vector.load %arg9[%c0_11, %c0_12] : memref<8x1xf32, #tpu.memory_space<vmem>>, vector<8x1xf32>
      %69 = tpu.concatenate %68, %68, %68, %68, %68, %68, %68, %68 in 0 : vector<8x1xf32>, vector<8x1xf32>, vector<8x1xf32>, vector<8x1xf32>, vector<8x1xf32>, vector<8x1xf32>, vector<8x1xf32>, vector<8x1xf32> -> vector<64x1xf32>
      %c0_13 = arith.constant 0 : index
      %c0_14 = arith.constant 0 : index
      %70 = vector.load %arg10[%c0_13, %c0_14] : memref<8x1xf32, #tpu.memory_space<vmem>>, vector<8x1xf32>
      %71 = tpu.concatenate %70, %70, %70, %70, %70, %70, %70, %70 in 0 : vector<8x1xf32>, vector<8x1xf32>, vector<8x1xf32>, vector<8x1xf32>, vector<8x1xf32>, vector<8x1xf32>, vector<8x1xf32>, vector<8x1xf32> -> vector<64x1xf32>
      %72 = vector.broadcast %69 : vector<64x1xf32> to vector<64x256xf32>
      %73 = arith.subf %67, %72 : vector<64x256xf32>
      %74 = vector.broadcast %71 : vector<64x1xf32> to vector<64x256xf32>
      %75 = arith.mulf %73, %74 : vector<64x256xf32>
      %cst_15 = arith.constant 0.000000e+00 : f32
      %76 = vector.broadcast %cst_15 : f32 to vector<64x256xf32>
      %77 = arith.cmpf ogt, %75, %76 : vector<64x256xf32>
      %cst_16 = arith.constant 2.000000e-01 : f32
      %78 = vector.broadcast %cst_16 : f32 to vector<64x256xf32>
      %79 = arith.mulf %78, %75 : vector<64x256xf32>
      %80 = arith.select %77, %75, %79 : vector<64x256xi1>, vector<64x256xf32>
      %81 = vector.extract_strided_slice %80 {offsets = [0, 0], sizes = [8, 256], strides = [1, 1]} : vector<64x256xf32> to vector<8x256xf32>
      %c0_17 = arith.constant 0 : index
      %c0_18 = arith.constant 0 : index
      %c0_19 = arith.constant 0 : index
      %c0_20 = arith.constant 0 : index
      %82 = vector.load %arg6[%c0_17, %c0_18, %c0_19, %c0_20] : memref<1x8x8x256xf32, #tpu.memory_space<vmem>>, vector<1x8x1x256xf32>
      %83 = vector.shape_cast %82 : vector<1x8x1x256xf32> to vector<8x256xf32>
      %84 = vector.shape_cast %81 : vector<8x256xf32> to vector<1x8x1x256xf32>
      tpu.vector_store %arg6[%c0_17, %c0_18, %c0_19, %c0_20], %84 {strides = array<i32>} : memref<1x8x8x256xf32, #tpu.memory_space<vmem>>, vector<1x8x1x256xf32>,
      %85 = vector.extract_strided_slice %80 {offsets = [8, 0], sizes = [8, 256], strides = [1, 1]} : vector<64x256xf32> to vector<8x256xf32>
      %c0_21 = arith.constant 0 : index
      %c0_22 = arith.constant 0 : index
      %c1 = arith.constant 1 : index
      %c0_23 = arith.constant 0 : index
      %86 = vector.load %arg6[%c0_21, %c0_22, %c1, %c0_23] : memref<1x8x8x256xf32, #tpu.memory_space<vmem>>, vector<1x8x1x256xf32>
      %87 = vector.shape_cast %86 : vector<1x8x1x256xf32> to vector<8x256xf32>
      %88 = vector.shape_cast %85 : vector<8x256xf32> to vector<1x8x1x256xf32>
      tpu.vector_store %arg6[%c0_21, %c0_22, %c1, %c0_23], %88 {strides = array<i32>} : memref<1x8x8x256xf32, #tpu.memory_space<vmem>>, vector<1x8x1x256xf32>,
      %89 = vector.extract_strided_slice %80 {offsets = [16, 0], sizes = [8, 256], strides = [1, 1]} : vector<64x256xf32> to vector<8x256xf32>
      %c0_24 = arith.constant 0 : index
      %c0_25 = arith.constant 0 : index
      %c2 = arith.constant 2 : index
      %c0_26 = arith.constant 0 : index
      %90 = vector.load %arg6[%c0_24, %c0_25, %c2, %c0_26] : memref<1x8x8x256xf32, #tpu.memory_space<vmem>>, vector<1x8x1x256xf32>
      %91 = vector.shape_cast %90 : vector<1x8x1x256xf32> to vector<8x256xf32>
      %92 = vector.shape_cast %89 : vector<8x256xf32> to vector<1x8x1x256xf32>
      tpu.vector_store %arg6[%c0_24, %c0_25, %c2, %c0_26], %92 {strides = array<i32>} : memref<1x8x8x256xf32, #tpu.memory_space<vmem>>, vector<1x8x1x256xf32>,
      %93 = vector.extract_strided_slice %80 {offsets = [24, 0], sizes = [8, 256], strides = [1, 1]} : vector<64x256xf32> to vector<8x256xf32>
      %c0_27 = arith.constant 0 : index
      %c0_28 = arith.constant 0 : index
      %c3 = arith.constant 3 : index
      %c0_29 = arith.constant 0 : index
      %94 = vector.load %arg6[%c0_27, %c0_28, %c3, %c0_29] : memref<1x8x8x256xf32, #tpu.memory_space<vmem>>, vector<1x8x1x256xf32>
      %95 = vector.shape_cast %94 : vector<1x8x1x256xf32> to vector<8x256xf32>
      %96 = vector.shape_cast %93 : vector<8x256xf32> to vector<1x8x1x256xf32>
      tpu.vector_store %arg6[%c0_27, %c0_28, %c3, %c0_29], %96 {strides = array<i32>} : memref<1x8x8x256xf32, #tpu.memory_space<vmem>>, vector<1x8x1x256xf32>,
      %97 = vector.extract_strided_slice %80 {offsets = [32, 0], sizes = [8, 256], strides = [1, 1]} : vector<64x256xf32> to vector<8x256xf32>
      %c0_30 = arith.constant 0 : index
      %c0_31 = arith.constant 0 : index
      %c4 = arith.constant 4 : index
      %c0_32 = arith.constant 0 : index
      %98 = vector.load %arg6[%c0_30, %c0_31, %c4, %c0_32] : memref<1x8x8x256xf32, #tpu.memory_space<vmem>>, vector<1x8x1x256xf32>
      %99 = vector.shape_cast %98 : vector<1x8x1x256xf32> to vector<8x256xf32>
      %100 = vector.shape_cast %97 : vector<8x256xf32> to vector<1x8x1x256xf32>
      tpu.vector_store %arg6[%c0_30, %c0_31, %c4, %c0_32], %100 {strides = array<i32>} : memref<1x8x8x256xf32, #tpu.memory_space<vmem>>, vector<1x8x1x256xf32>,
      %101 = vector.extract_strided_slice %80 {offsets = [40, 0], sizes = [8, 256], strides = [1, 1]} : vector<64x256xf32> to vector<8x256xf32>
      %c0_33 = arith.constant 0 : index
      %c0_34 = arith.constant 0 : index
      %c5 = arith.constant 5 : index
      %c0_35 = arith.constant 0 : index
      %102 = vector.load %arg6[%c0_33, %c0_34, %c5, %c0_35] : memref<1x8x8x256xf32, #tpu.memory_space<vmem>>, vector<1x8x1x256xf32>
      %103 = vector.shape_cast %102 : vector<1x8x1x256xf32> to vector<8x256xf32>
      %104 = vector.shape_cast %101 : vector<8x256xf32> to vector<1x8x1x256xf32>
      tpu.vector_store %arg6[%c0_33, %c0_34, %c5, %c0_35], %104 {strides = array<i32>} : memref<1x8x8x256xf32, #tpu.memory_space<vmem>>, vector<1x8x1x256xf32>,
      %105 = vector.extract_strided_slice %80 {offsets = [48, 0], sizes = [8, 256], strides = [1, 1]} : vector<64x256xf32> to vector<8x256xf32>
      %c0_36 = arith.constant 0 : index
      %c0_37 = arith.constant 0 : index
      %c6 = arith.constant 6 : index
      %c0_38 = arith.constant 0 : index
      %106 = vector.load %arg6[%c0_36, %c0_37, %c6, %c0_38] : memref<1x8x8x256xf32, #tpu.memory_space<vmem>>, vector<1x8x1x256xf32>
      %107 = vector.shape_cast %106 : vector<1x8x1x256xf32> to vector<8x256xf32>
      %108 = vector.shape_cast %105 : vector<8x256xf32> to vector<1x8x1x256xf32>
      tpu.vector_store %arg6[%c0_36, %c0_37, %c6, %c0_38], %108 {strides = array<i32>} : memref<1x8x8x256xf32, #tpu.memory_space<vmem>>, vector<1x8x1x256xf32>,
      %109 = vector.extract_strided_slice %80 {offsets = [56, 0], sizes = [8, 256], strides = [1, 1]} : vector<64x256xf32> to vector<8x256xf32>
      %c0_39 = arith.constant 0 : index
      %c0_40 = arith.constant 0 : index
      %c7 = arith.constant 7 : index
      %c0_41 = arith.constant 0 : index
      %110 = vector.load %arg6[%c0_39, %c0_40, %c7, %c0_41] : memref<1x8x8x256xf32, #tpu.memory_space<vmem>>, vector<1x8x1x256xf32>
      %111 = vector.shape_cast %110 : vector<1x8x1x256xf32> to vector<8x256xf32>
      %112 = vector.shape_cast %109 : vector<8x256xf32> to vector<1x8x1x256xf32>
      tpu.vector_store %arg6[%c0_39, %c0_40, %c7, %c0_41], %112 {strides = array<i32>} : memref<1x8x8x256xf32, #tpu.memory_space<vmem>>, vector<1x8x1x256xf32>,
    } else {
    }
    return
  }
  func.func @transform_0(%arg0: i32, %arg1: i32, %arg2: i32) -> (i32, i32, i32, i32) {
    %c1_i32 = arith.constant 1 : i32
    %0 = arith.subi %c1_i32, %arg1 : i32
    %1 = arith.muli %arg2, %0 : i32
    %c1_i32_0 = arith.constant 1 : i32
    %2 = arith.muli %c1_i32_0, %arg1 : i32
    %3 = arith.addi %1, %2 : i32
    %c0_i32 = arith.constant 0 : i32
    %c0_i32_1 = arith.constant 0 : i32
    %c0_i32_2 = arith.constant 0 : i32
    return %arg0, %3, %c0_i32, %c0_i32_1 : i32, i32, i32, i32
  }
  func.func @transform_1(%arg0: i32, %arg1: i32, %arg2: i32) -> (i32, i32, i32) {
    %c0_i32 = arith.constant 0 : i32
    %c0_i32_0 = arith.constant 0 : i32
    %c0_i32_1 = arith.constant 0 : i32
    %c0_i32_2 = arith.constant 0 : i32
    return %c0_i32, %c0_i32_0, %c0_i32_1 : i32, i32, i32
  }
  func.func @transform_2(%arg0: i32, %arg1: i32, %arg2: i32) -> (i32, i32) {
    %c0_i32 = arith.constant 0 : i32
    %c0_i32_0 = arith.constant 0 : i32
    %c0_i32_1 = arith.constant 0 : i32
    return %c0_i32, %c0_i32_0 : i32, i32
  }
  func.func @transform_3(%arg0: i32, %arg1: i32, %arg2: i32) -> (i32, i32, i32, i32) {
    %0 = arith.muli %arg2, %arg1 : i32
    %c0_i32 = arith.constant 0 : i32
    %c0_i32_0 = arith.constant 0 : i32
    %c0_i32_1 = arith.constant 0 : i32
    return %arg0, %c0_i32, %0, %c0_i32_0 : i32, i32, i32, i32
  }
}

</mosaic_0001>

<llo_original>
// kernel: hr_skip_forward.1
$region0: #{hr_skip_forward.1}
  #allocation0 [shape = 'u32[]', space=smem, size = 0x4, offset = 0x4, fixed_abs, tag = 'smem constant byte address 0x4 - core index']
  #allocation1 [shape = 'u32[144,128]{1,0:T(1,128)}', space=vmem, size = 0x12000, scoped, tag = 'internal scratch']
  #allocation2 [shape = 'f32[64,1]{1,0:T(8,128)}', space=vmem, size = 0x8000, scoped, tag = 'scratch operand']
  #allocation3 [shape = 'f32[64,1]{1,0:T(8,128)}', space=vmem, size = 0x8000, scoped, tag = 'scratch operand']
  #allocation4 [shape = 'f32[8,1]{1,0:T(8,128)}', space=vmem, size = 0x1000, scoped, tag = 'scratch operand']
  #allocation5 [shape = 'f32[8,1]{1,0:T(8,128)}', space=vmem, size = 0x1000, scoped, tag = 'scratch operand']
  #allocation6 [shape = 'bf16[2,64,256]{2,1,0:T(16,128)(2,1)}', space=vmem, size = 0x10000, scoped, tag = 'scratch operand']
  %s0 = inlined_call_operand.vmem [shape: bf16[2,2,36,256], index: 0, kind: input, shape index: {}]
  %s1 = inlined_call_operand.vmem [shape: bf16[3,64,36], index: 1, kind: input, shape index: {}]
  %s2 = inlined_call_operand.vmem [shape: bf16[256,256], index: 2, kind: input, shape index: {}]
  %s3 = inlined_call_operand.vmem [shape: f32[2,8,16,256], index: 3, kind: output, shape index: {}]
  %s4 = sld [smem:[#allocation0]]
  $region80: #{hr_skip_forward.1} parent=0
    _
  %s6 = ssub.s32 1, %s4
  %s7 = scalar_select 0, %s6, %s4
  $region1: #{hr_skip_forward.1} parent=0
    #allocation7 [shape = 'u8[131072]{0}', space=vmem, size = 0x20000, scoped, tag = 'output window, operand 0']
    loop: start=0, step=1, limit=10
    $region2: #{hr_skip_forward.1} parent=1 // loop_pre_header
      _
    $region3: #{hr_skip_forward.1} parent=1 // loop_header
      %s9 = sphi 0, %s13
      %p10 = scmp.ge.s32.totalorder %s9, 10
      %s16 = sphi 0, %s35
      %s17 = sphi 0, %s31
      %s18 = sphi 0, %s27
      %s19 = sphi 0, %s16
      %s20 = sphi 0, %s17
      %s21 = sphi 0, %s18
      %s22 = sphi 0, %s19
      %s23 = sphi 0, %s20
      %s24 = sphi 0, %s21
      %s46 = sphi 0, %s48
      %s49 = sphi 0, %s46
      %s50 = sphi 0, %s49
      %s66 = sphi 0, %s50
      %s70 = sphi 0, %s70
      %s72 = sphi 0, %s70
      %s73 = sphi 0, %s72
      %s87 = sphi 0, %s73
      %s91 = sphi 0, %s91
      %s93 = sphi 0, %s91
      %s94 = sphi 0, %s93
      %s108 = sphi 0, %s94
      %s118 = sphi 0, %s120
      %s121 = sphi 0, %s118
      %s122 = sphi 0, %s121
      %s138 = sphi 0, %s122
    $region4: #{hr_skip_forward.1} parent=1 // loop_header_branch
      %12 = sbr.rel (%p10) target = $region8
    $region5: #{hr_skip_forward.1} parent=1 // loop_body
      %s14 = ssub.s32 %s9, 1
      %s15 = ssub.s32 %s9, 2
      %s25 = sadd.s32 1, %s18
      %p26 = scmp.ge.s32.totalorder %s25, 2
      %s27 = scalar_select %p26, 0, %s25
      %s28 = sadd.s32 1, %s17
      %s29 = scalar_select %p26, %s28, %s17
      %p30 = scmp.ge.s32.totalorder %s29, 2
      %s31 = scalar_select %p30, 0, %s29
      %s32 = sadd.s32 1, %s16
      %s33 = scalar_select %p30, %s32, %s16
      %p34 = scmp.ge.s32.totalorder %s33, 2
      %s35 = scalar_select %p34, 0, %s33
      %s36 = ssub.s32 1, %s17
      %s37 = smul.u32 %s18, %s36
      %s38 = sadd.s32 %s37, %s17
      %s39 = ssub.s32 1, %s31
      %s40 = smul.u32 %s27, %s39
      %s41 = sadd.s32 %s40, %s31
      %s42 = ssub.s32 %s16, %s35
      %s43 = ssub.s32 %s38, %s41
      %s44 = sor.u32 %s42, %s43
      %p45 = scmp.eq.s32.totalorder %s44, 0
      %s47 = sadd.s32 %s46, 1
      %s48 = scalar_select %p45, %s46, %s47
      %p51 = pneg %p45
      %p52 = scmp.eq.s32.totalorder %s9, 7
      %p53 = por %p51, %p52
      %p54 = scmp.ne.s32.totalorder %s46, %s49
      %p55 = scmp.eq.s32.totalorder %s9, 0
      %p56 = por %p54, %p55
      %p57 = scmp.ne.s32.totalorder %s46, %s49
      %p58 = scmp.eq.s32.totalorder %s14, 7
      %p59 = por %p57, %p58
      %p60 = scmp.ne.s32.totalorder %s49, %s50
      %p61 = scmp.eq.s32.totalorder %s14, 0
      %p62 = por %p60, %p61
      %p63 = scmp.ne.s32.totalorder %s49, %s50
      %p64 = scmp.eq.s32.totalorder %s15, 7
      %p65 = por %p63, %p64
      %p67 = scmp.ne.s32.totalorder %s50, %s66
      %p68 = scmp.eq.s32.totalorder %s15, 0
      %p69 = por %p67, %p68
      %s71 = sadd.s32 %s70, 1
      %p74 = scmp.eq.s32.totalorder %s9, 7
      %p75 = scmp.ne.s32.totalorder %s70, %s72
      %p76 = scmp.eq.s32.totalorder %s9, 0
      %p77 = por %p75, %p76
      %p78 = scmp.ne.s32.totalorder %s70, %s72
      %p79 = scmp.eq.s32.totalorder %s14, 7
      %p80 = por %p78, %p79
      %p81 = scmp.ne.s32.totalorder %s72, %s73
      %p82 = scmp.eq.s32.totalorder %s14, 0
      %p83 = por %p81, %p82
      %p84 = scmp.ne.s32.totalorder %s72, %s73
      %p85 = scmp.eq.s32.totalorder %s15, 7
      %p86 = por %p84, %p85
      %p88 = scmp.ne.s32.totalorder %s73, %s87
      %p89 = scmp.eq.s32.totalorder %s15, 0
      %p90 = por %p88, %p89
      %s92 = sadd.s32 %s91, 1
      %p95 = scmp.eq.s32.totalorder %s9, 7
      %p96 = scmp.ne.s32.totalorder %s91, %s93
      %p97 = scmp.eq.s32.totalorder %s9, 0
      %p98 = por %p96, %p97
      %p99 = scmp.ne.s32.totalorder %s91, %s93
      %p100 = scmp.eq.s32.totalorder %s14, 7
      %p101 = por %p99, %p100
      %p102 = scmp.ne.s32.totalorder %s93, %s94
      %p103 = scmp.eq.s32.totalorder %s14, 0
      %p104 = por %p102, %p103
      %p105 = scmp.ne.s32.totalorder %s93, %s94
      %p106 = scmp.eq.s32.totalorder %s15, 7
      %p107 = por %p105, %p106
      %p109 = scmp.ne.s32.totalorder %s94, %s108
      %p110 = scmp.eq.s32.totalorder %s15, 0
      %p111 = por %p109, %p110
      %s112 = smul.u32 %s18, %s17
      %s113 = smul.u32 %s27, %s31
      %s114 = ssub.s32 %s16, %s35
      %s115 = ssub.s32 %s112, %s113
      %s116 = sor.u32 %s114, %s115
      %p117 = scmp.eq.s32.totalorder %s116, 0
      %s119 = sadd.s32 %s118, 1
      %s120 = scalar_select %p117, %s118, %s119
      %p123 = pneg %p117
      %p124 = scmp.eq.s32.totalorder %s9, 7
      %p125 = por %p123, %p124
      %p126 = scmp.ne.s32.totalorder %s118, %s121
      %p127 = scmp.eq.s32.totalorder %s9, 0
      %p128 = por %p126, %p127
      %p129 = scmp.ne.s32.totalorder %s118, %s121
      %p130 = scmp.eq.s32.totalorder %s14, 7
      %p131 = por %p129, %p130
      %p132 = scmp.ne.s32.totalorder %s121, %s122
      %p133 = scmp.eq.s32.totalorder %s14, 0
      %p134 = por %p132, %p133
      %p135 = scmp.ne.s32.totalorder %s121, %s122
      %p136 = scmp.eq.s32.totalorder %s15, 7
      %p137 = por %p135, %p136
      %p139 = scmp.ne.s32.totalorder %s122, %s138
      %p140 = scmp.eq.s32.totalorder %s15, 0
      %p141 = por %p139, %p140
      %p142 = scmp.le.s32.totalorder 1, %s9
      %p143 = scmp.lt.s32.totalorder %s9, 9
      %p144 = pnand %p142, %p143
      %p145 = pneg %p144
      // Predicated region
      $region9: #{hr_skip_forward.1} parent=5 // pred_check
        _
      $region10: #{hr_skip_forward.1} parent=5 // pred_check_branch
        %147 = sbr.rel (%p144) target = $region12
      $region11: #{hr_skip_forward.1} parent=5 // pred_region
        %s148 = ssub.s32 %s9, 1
        // Predicated region
        $region13: #{hr_skip_forward.1} parent=11 // pred_check
          %p149 = pneg %p83
        $region14: #{hr_skip_forward.1} parent=11 // pred_check_branch
          %151 = sbr.rel (%p149) target = $region16
        $region15: #{hr_skip_forward.1} parent=11 // pred_region
          _
        $region16: #{hr_skip_forward.1} parent=11 // pred_fallthru
          _
        // Predicated region
        $region17: #{hr_skip_forward.1} parent=11 // pred_check
          %p152 = pneg %p104
        $region18: #{hr_skip_forward.1} parent=11 // pred_check_branch
          %154 = sbr.rel (%p152) target = $region20
        $region19: #{hr_skip_forward.1} parent=11 // pred_region
          _
        $region20: #{hr_skip_forward.1} parent=11 // pred_fallthru
          _
      $region12: #{hr_skip_forward.1} parent=5 // pred_fallthru
        _
      %p155 = scmp.lt.s32.totalorder %s9, 8
      // Predicated region
      $region21: #{hr_skip_forward.1} parent=5 // pred_check
        %p156 = pneg %p155
      $region22: #{hr_skip_forward.1} parent=5 // pred_check_branch
        %158 = sbr.rel (%p156) target = $region24
      $region23: #{hr_skip_forward.1} parent=5 // pred_region
        // Predicated region
        $region25: #{hr_skip_forward.1} parent=23 // pred_check
          %p159 = pneg %p56
        $region26: #{hr_skip_forward.1} parent=23 // pred_check_branch
          %161 = sbr.rel (%p159) target = $region28
        $region27: #{hr_skip_forward.1} parent=23 // pred_region
          %s162 = ssub.s32 1, %s17
          %s163 = smul.u32 %s18, %s162
          %s164 = sadd.s32 %s163, %s17
          %p165 = scmp.lt.s32.totalorder %s16, 1
          %s166 = scalar_select %p165, %s16, 1
          %p167 = scmp.lt.s32.totalorder %s164, 1
          %s168 = scalar_select %p167, %s164, 1
          %s169 = smul.addr %s168, 10
          %s170 = smul.addr %s166, 20
          %s171 = sadd.s32 %s169, %s170
          %s172 = smul.addr %s171, 4
          %s173 = scalar_lea.vmem %s0, %s172
          %s174 = ssub.s32 1, %s17
          %s175 = smul.u32 %s18, %s174
          %s176 = sadd.s32 %s175, %s17
        $region28: #{hr_skip_forward.1} parent=23 // pred_fallthru
          _
      $region24: #{hr_skip_forward.1} parent=5 // pred_fallthru
        _
      %p177 = scmp.le.s32.totalorder 1, %s9
      %p178 = scmp.lt.s32.totalorder %s9, 9
      %p179 = pnand %p177, %p178
      %p180 = pneg %p179
      // Predicated region
      $region29: #{hr_skip_forward.1} parent=5 // pred_check
        _
      $region30: #{hr_skip_forward.1} parent=5 // pred_check_branch
        %182 = sbr.rel (%p179) target = $region32
      $region31: #{hr_skip_forward.1} parent=5 // pred_region
        %s183 = ssub.s32 %s9, 1
        %s184 = ssub.s32 1, %s20
        %s185 = smul.u32 %s21, %s184
        %s186 = sadd.s32 %s185, %s20
        %p187 = scmp.lt.s32.totalorder %s19, 1
        %s188 = scalar_select %p187, %s19, 1
        %p189 = scmp.lt.s32.totalorder %s186, 1
        %s190 = scalar_select %p189, %s186, 1
        %s191 = smul.addr %s190, 10
        %s192 = smul.addr %s188, 20
        %s193 = sadd.s32 %s191, %s192
        %s194 = smul.addr %s193, 4
        %s195 = scalar_lea.vmem %s0, %s194
        %p196 = pneg %p62
        %p197 = pneg %p59
        %p198 = pneg %p83
        %p199 = pneg %p80
        %p200 = pneg %p104
        %p201 = pneg %p101
        %p202 = pneg %p134
        %p203 = pneg %p131
        %s204 = sand.u32 %s121, 1
        %s205 = sand.u32 %s121, 1
        %s206 = smul.addr %s205, 128
        %s207 = scalar_lea.vmem [#allocation7], %s206
        %s208 = ssub.s32 1, %s20
        %s209 = smul.u32 %s21, %s208
        %s210 = sadd.s32 %s209, %s20
        %p211 = scmp.lt.s32.totalorder %s19, 1
        %s212 = scalar_select %p211, %s19, 1
        %p213 = scmp.lt.s32.totalorder %s210, 1
        %s214 = scalar_select %p213, %s210, 1
        %s215 = smul.addr %s214, 10
        %s216 = smul.addr %s212, 20
        %s217 = sadd.s32 %s215, %s216
        %s218 = smul.addr %s217, 4
        %s219 = scalar_lea.vmem %s0, %s218
        %s220 = ssub.s32 1, %s20
        %s221 = smul.u32 %s21, %s220
        %s222 = sadd.s32 %s221, %s20
        %s223 = smul.u32 %s21, %s20
        %p227 = scmp.eq.s32.totalorder %s20, 0
        %p228 = scmp.eq.s32.totalorder %s21, 0
        %p229 = pnand %p227, %p228
        %p230 = pneg %p229
        // Predicated region
        $region33: #{hr_skip_forward.1} parent=31 // pred_check
          _
        $region34: #{hr_skip_forward.1} parent=31 // pred_check_branch
          %232 = sbr.rel (%p229) target = $region36
        $region35: #{hr_skip_forward.1} parent=31 // pred_region
          %vm233 = vcmask 7168
          %234 = vst.msk [vmem:[#allocation2] sm:$0xff] %vm233, 0.0
          %235 = vst.msk [vmem:[#allocation2 + $0x8] sm:$0xff] %vm233, 0.0
          %236 = vst.msk [vmem:[#allocation2 + $0x10] sm:$0xff] %vm233, 0.0
          %237 = vst.msk [vmem:[#allocation2 + $0x18] sm:$0xff] %vm233, 0.0
          %238 = vst.msk [vmem:[#allocation2 + $0x20] sm:$0xff] %vm233, 0.0
          %239 = vst.msk [vmem:[#allocation2 + $0x28] sm:$0xff] %vm233, 0.0
          %240 = vst.msk [vmem:[#allocation2 + $0x30] sm:$0xff] %vm233, 0.0
          %241 = vst.msk [vmem:[#allocation2 + $0x38] sm:$0xff] %vm233, 0.0
          %242 = vst.msk [vmem:[#allocation3] sm:$0xff] %vm233, 0.0
          %243 = vst.msk [vmem:[#allocation3 + $0x8] sm:$0xff] %vm233, 0.0
          %244 = vst.msk [vmem:[#allocation3 + $0x10] sm:$0xff] %vm233, 0.0
          %245 = vst.msk [vmem:[#allocation3 + $0x18] sm:$0xff] %vm233, 0.0
          %246 = vst.msk [vmem:[#allocation3 + $0x20] sm:$0xff] %vm233, 0.0
          %247 = vst.msk [vmem:[#allocation3 + $0x28] sm:$0xff] %vm233, 0.0
          %248 = vst.msk [vmem:[#allocation3 + $0x30] sm:$0xff] %vm233, 0.0
          %249 = vst.msk [vmem:[#allocation3 + $0x38] sm:$0xff] %vm233, 0.0
        $region36: #{hr_skip_forward.1} parent=31 // pred_fallthru
          _
        // Predicated region
        $region37: #{hr_skip_forward.1} parent=31 // pred_check
          %p250 = pneg %p227
        $region38: #{hr_skip_forward.1} parent=31 // pred_check_branch
          %252 = sbr.rel (%p250) target = $region40
        $region39: #{hr_skip_forward.1} parent=31 // pred_region
          %v253 = vld [vmem:[%s219] sm:$0xff]
          %v254 = vld [vmem:[%s219 + $0x8] sm:$0xff]
          %v255 = vld [vmem:[%s219 + $0x10] sm:$0xff]
          %v256 = vld [vmem:[%s219 + $0x18] sm:$0xff]
          %v257 = vld [vmem:[%s219 + $0x20] sm:$0x33]
          %v263 = vunpack.c.l.b16 %v253
          %v264 = vunpack.c.h.b16 %v253
          %v265 = vunpack.c.l.b16 %v254
          %v266 = vunpack.c.h.b16 %v254
          %v267 = vunpack.c.l.b16 %v255
          %v268 = vunpack.c.h.b16 %v255
          %v269 = vunpack.c.l.b16 %v256
          %v270 = vunpack.c.h.b16 %v256
          %v271 = vunpack.c.l.b16 %v257
          %v272 = vunpack.c.h.b16 %v257
          %v273 = vpack.c.b16 %v265, %v263
          %v274 = vpack.c.b16 %v266, %v264
          %v275 = vpack.c.b16 %v269, %v267
          %v276 = vpack.c.b16 %v270, %v268
          %v277 = vpack.c.b16 %v271, %v271
          %v278 = vpack.c.b16 %v272, %v272
          %279 = vrot.lane.b32.xlu0 %v273, 1
          %v280 = vpop.permute.xlu0 %279
          %281 = vrot.lane.b32.xlu0 %v274, 1
          %v282 = vpop.permute.xlu0 %281
          %283 = vrot.lane.b32.xlu0 %v275, 1
          %v284 = vpop.permute.xlu0 %283
          %285 = vrot.lane.b32.xlu0 %v276, 1
          %v286 = vpop.permute.xlu0 %285
          %287 = vrot.lane.b32.xlu0 %v277, 1
          %v288 = vpop.permute.xlu0 %287
          %289 = vrot.lane.b32.xlu0 %v278, 1
          %v290 = vpop.permute.xlu0 %289
          %vm291 = vcmask 7168
          %v292 = vsel %vm291, %v280, %v282
          %v293 = vsel %vm291, %v284, %v286
          %v294 = vsel %vm291, %v288, %v290
          %vm298 = vcmask 7168
          %v301 = vsel %vm298, 0, %v280
          %v304 = vsel %vm298, 0, %v284
          %v307 = vsel %vm298, 0, %v288
          %309 = vrot.lane.b32.xlu0 %v273, 127
          %v310 = vpop.permute.xlu0 %309
          %311 = vrot.lane.b32.xlu0 %v274, 127
          %v312 = vpop.permute.xlu0 %311
          %313 = vrot.lane.b32.xlu0 %v275, 127
          %v314 = vpop.permute.xlu0 %313
          %315 = vrot.lane.b32.xlu0 %v276, 127
          %v316 = vpop.permute.xlu0 %315
          %317 = vrot.lane.b32.xlu0 %v277, 127
          %v318 = vpop.permute.xlu0 %317
          %319 = vrot.lane.b32.xlu0 %v278, 127
          %v320 = vpop.permute.xlu0 %319
          %vm321 = vcmask 1039360
          %v322 = vsel %vm321, %v310, %v312
          %v323 = vsel %vm321, %v314, %v316
          %v324 = vsel %vm321, %v318, %v320
          %vm328 = vcmask 1039360
          %v330 = vsel %vm328, %v312, 0
          %v333 = vsel %vm328, %v316, 0
          %v336 = vsel %vm328, %v320, 0
          %v338 = vlaneseq
          %v339 = vand.u32 %v338, 127
          %v340 = vadd.s32 %v339, 128
          %vm341 = vcmp.lt.s32.totalorder %v339, 0
          %v342 = vsub.s32 0, %v339
          %v343 = vsel %vm341, %v342, %v339
          %v344 = vshrl.u32 %v343, 3
          %v345 = vand.u32 %v343, 7
          %v346 = vsub.s32 0, %v345
          %v347 = vsel %vm341, %v346, %v345
          %vm348 = vcmp.lt.s32.totalorder %v340, 0
          %v349 = vsub.s32 0, %v340
          %v350 = vsel %vm348, %v349, %v340
          %v351 = vshrl.u32 %v350, 3
          %v352 = vand.u32 %v350, 7
          %v353 = vsub.s32 0, %v352
          %v354 = vsel %vm348, %v353, %v352
          %vm355 = vcmp.ne.s32.totalorder %v347, 0
          %vm356 = vcmp.ne.s32.totalorder %v354, 0
          %vm357 = vcmp.lt.s32.totalorder %v347, 0
          %vm358 = vcmp.lt.s32.totalorder %v354, 0
          %vm359 = vmand %vm357, %vm355
          %vm360 = vmand %vm358, %vm356
          %v361 = vadd.s32 %v347, 8
          %v362 = vadd.s32 %v354, 8
          %v363 = vsel %vm359, %v361, %v347
          %v364 = vsel %vm360, %v362, %v354
          %vm365 = vcmp.eq.s32.totalorder %v363, 0
          %vm366 = vcmp.eq.s32.totalorder %v364, 0
          %v367 = vsel %vm365, 1, 0
          %v368 = vsel %vm366, 1, 0
          %vm369 = vcmp.eq.s32.totalorder %v367, 1
          %vm370 = vcmp.eq.s32.totalorder %v368, 1
          %vm371 = vmpackc.low %vm370, %vm369
          %v372 = vsel %vm371, 65537, 0
          %v373 = vlaneseq
          %v374 = vshrl.u32 %v373, 7
          %v375 = vsub.s32 0, %v374
          %v376 = vrot.slane %v372, %v375
          %v377 = vlaneseq
          %v378 = vshrl.u32 %v377, 7
          %v379 = vsub.s32 4, %v378
          %v380 = vrot.slane %v372, %v379
          %vm381 = vcmp.ne.s16.totalorder %v376, 0
          %vm382 = vcmp.ne.s16.totalorder %v380, 0
          %v383 = vsel %vm381, 0, %v301
          %v384 = vsel %vm382, 0, %v292
          %v385 = vsel %vm381, 0, %v304
          %v386 = vsel %vm382, 0, %v293
          %v387 = vsel %vm381, 0, %v307
          %v388 = vsel %vm382, 0, %v294
          %vm389 = vcmp.eq.s32.totalorder %v363, 7
          %vm390 = vcmp.eq.s32.totalorder %v364, 7
          %v391 = vsel %vm389, 1, 0
          %v392 = vsel %vm390, 1, 0
          %vm393 = vcmp.eq.s32.totalorder %v391, 1
          %vm394 = vcmp.eq.s32.totalorder %v392, 1
          %vm395 = vmpackc.low %vm394, %vm393
          %v396 = vsel %vm395, 65537, 0
          %v397 = vlaneseq
          %v398 = vshrl.u32 %v397, 7
          %v399 = vsub.s32 0, %v398
          %v400 = vrot.slane %v396, %v399
          %v401 = vlaneseq
          %v402 = vshrl.u32 %v401, 7
          %v403 = vsub.s32 4, %v402
          %v404 = vrot.slane %v396, %v403
          %vm405 = vcmp.ne.s16.totalorder %v400, 0
          %vm406 = vcmp.ne.s16.totalorder %v404, 0
          %v407 = vsel %vm405, 0, %v322
          %v408 = vsel %vm406, 0, %v330
          %v409 = vsel %vm405, 0, %v323
          %v410 = vsel %vm406, 0, %v333
          %v411 = vsel %vm405, 0, %v324
          %v412 = vsel %vm406, 0, %v336
          %v413 = vld [vmem:[%s1] sm:$0xf]
          %v414 = vld [vmem:[%s1 + $0x4] sm:$0xf]
          %v415 = vld [vmem:[%s1 + $0x8] sm:$0xf]
          %v416 = vld [vmem:[%s1 + $0xc] sm:$0xf]
          %v417 = vld [vmem:[%s1 + $0x10] sm:$0xf]
          %v418 = vld [vmem:[%s1 + $0x14] sm:$0xf]
          %v419 = vld [vmem:[%s1 + $0x18] sm:$0xf]
          %v420 = vld [vmem:[%s1 + $0x1c] sm:$0xf]
          %s421 = scalar_lea.vmem %s1, 32
          %v422 = vld [vmem:[%s421] sm:$0xf]
          %v423 = vld [vmem:[%s421 + $0x4] sm:$0xf]
          %v424 = vld [vmem:[%s421 + $0x8] sm:$0xf]
          %v425 = vld [vmem:[%s421 + $0xc] sm:$0xf]
          %v426 = vld [vmem:[%s421 + $0x10] sm:$0xf]
          %v427 = vld [vmem:[%s421 + $0x14] sm:$0xf]
          %v428 = vld [vmem:[%s421 + $0x18] sm:$0xf]
          %v429 = vld [vmem:[%s421 + $0x1c] sm:$0xf]
          %v438 = vunpack.c.l.b16 %v422
          %v439 = vunpack.c.l.b16 %v423
          %v440 = vunpack.c.l.b16 %v424
          %v441 = vunpack.c.l.b16 %v425
          %v442 = vunpack.c.l.b16 %v426
          %v443 = vunpack.c.l.b16 %v427
          %v444 = vunpack.c.l.b16 %v428
          %v445 = vunpack.c.l.b16 %v429
          %v446 = vpack.c.b16 %v439, %v438
          %v447 = vpack.c.b16 %v441, %v440
          %v448 = vpack.c.b16 %v443, %v442
          %v449 = vpack.c.b16 %v445, %v444
          %vm454 = vcmask 293888
          %v456 = vsel %vm454, %v446, 0
          %v459 = vsel %vm454, %v447, 0
          %v462 = vsel %vm454, %v448, 0
          %v465 = vsel %vm454, %v449, 0
          %vm467 = vcmask 1041408
          %v469 = vsel %vm467, %v277, 0
          %v472 = vsel %vm467, %v278, 0
          %474 = vmatprep.subr.bf16.mxu0 %v274
          %475 = vmatpush1.bf16.msra.mxu0 %v273
          %476 = vmatprep.subr.bf16.mxu0 %v276
          %477 = vmatpush1.bf16.msra.mxu0 %v275
          %478 = vmatprep.subr.bf16.mxu0 %v472
          %479 = vmatpush1.bf16.msra.mxu0 %v469
          %480 = vmatprep.subr.bf16.mxu0 0
          %481 = vmatpush1.bf16.msra.mxu0 0
          %482 = vmatprep.subr.bf16.mxu0 0
          %483 = vmatpush1.bf16.msra.mxu0 0
          %484 = vmatprep.subr.bf16.mxu0 0
          %485 = vmatpush1.bf16.msra.mxu0 0
          %486 = vmatprep.subr.bf16.mxu0 0
          %487 = vmatpush1.bf16.msra.mxu0 0
          %488 = vmatprep.subr.bf16.mxu0 0
          %489 = vmatpush1.bf16.msra.mxu0 0
          %490 = vmatprep.subr.bf16.mxu0 0
          %491 = vmatpush1.bf16.msra.mxu0 0
          %492 = vmatprep.subr.bf16.mxu0 0
          %493 = vmatpush1.bf16.msra.mxu0 0
          %494 = vmatprep.subr.bf16.mxu0 0
          %495 = vmatpush1.bf16.msra.mxu0 0
          %496 = vmatprep.subr.bf16.mxu0 0
          %497 = vmatpush1.bf16.msra.mxu0 0
          %498 = vmatprep.subr.bf16.mxu0 0
          %499 = vmatpush1.bf16.msra.mxu0 0
          %500 = vmatprep.subr.bf16.mxu0 0
          %501 = vmatpush1.bf16.msra.mxu0 0
          %502 = vmatprep.subr.bf16.mxu0 0
          %503 = vmatpush1.bf16.msra.mxu0 0
          %504 = vmatprep.subr.bf16.mxu0 0
          %505 = vmatpush1.bf16.msra.mxu0 0
          %506 = vmatprep.mubr.bf16.mxu0 0
          %507 = vmatmul.mubr.bf16.gmra.mrb[0].mxu0 %v456
          %v508 = vpop.f32.mrb[0].mxu0
          %v509 = vadd.f32 0.0, %v508
          %v510 = vpop.f32.mrb[0].mxu0
          %v511 = vadd.f32 0.0, %v510
          %v512 = vpop.f32.mrb[0].mxu0
          %v513 = vadd.f32 0.0, %v512
          %v514 = vpop.f32.mrb[0].mxu0
          %v515 = vadd.f32 0.0, %v514
          %516 = vmatprep.mubr.bf16.mxu0 0
          %517 = vmatmul.mubr.bf16.gmra.mrb[0].mxu0 %v459
          %v518 = vpop.f32.mrb[0].mxu0
          %v519 = vadd.f32 0.0, %v518
          %v520 = vpop.f32.mrb[0].mxu0
          %v521 = vadd.f32 0.0, %v520
          %v522 = vpop.f32.mrb[0].mxu0
          %v523 = vadd.f32 0.0, %v522
          %v524 = vpop.f32.mrb[0].mxu0
          %v525 = vadd.f32 0.0, %v524
          %526 = vmatprep.mubr.bf16.mxu0 0
          %527 = vmatmul.mubr.bf16.gmra.mrb[0].mxu0 %v462
          %v528 = vpop.f32.mrb[0].mxu0
          %v529 = vadd.f32 0.0, %v528
          %v530 = vpop.f32.mrb[0].mxu0
          %v531 = vadd.f32 0.0, %v530
          %v532 = vpop.f32.mrb[0].mxu0
          %v533 = vadd.f32 0.0, %v532
          %v534 = vpop.f32.mrb[0].mxu0
          %v535 = vadd.f32 0.0, %v534
          %536 = vmatprep.mubr.bf16.mxu0 0
          %537 = vmatmul.mubr.bf16.gmra.mrb[0].mxu0 %v465
          %v538 = vpop.f32.mrb[0].mxu0
          %v539 = vadd.f32 0.0, %v538
          %v540 = vpop.f32.mrb[0].mxu0
          %v541 = vadd.f32 0.0, %v540
          %v542 = vpop.f32.mrb[0].mxu0
          %v543 = vadd.f32 0.0, %v542
          %v544 = vpop.f32.mrb[0].mxu0
          %v545 = vadd.f32 0.0, %v544
          %546 = vdwg.mxu0
          %v555 = vunpack.c.l.b16 %v413
          %v556 = vunpack.c.l.b16 %v414
          %v557 = vunpack.c.l.b16 %v415
          %v558 = vunpack.c.l.b16 %v416
          %v559 = vunpack.c.l.b16 %v417
          %v560 = vunpack.c.l.b16 %v418
          %v561 = vunpack.c.l.b16 %v419
          %v562 = vunpack.c.l.b16 %v420
          %v563 = vpack.c.b16 %v556, %v555
          %v564 = vpack.c.b16 %v558, %v557
          %v565 = vpack.c.b16 %v560, %v559
          %v566 = vpack.c.b16 %v562, %v561
          %v568 = vsel %vm454, %v563, 0
          %v571 = vsel %vm454, %v564, 0
          %v574 = vsel %vm454, %v565, 0
          %v577 = vsel %vm454, %v566, 0
          %v580 = vsel %vm467, %v387, 0
          %v583 = vsel %vm467, %v388, 0
          %585 = vmatprep.subr.bf16.mxu0 %v384
          %586 = vmatpush1.bf16.msra.mxu0 %v383
          %587 = vmatprep.subr.bf16.mxu0 %v386
          %588 = vmatpush1.bf16.msra.mxu0 %v385
          %589 = vmatprep.subr.bf16.mxu0 %v583
          %590 = vmatpush1.bf16.msra.mxu0 %v580
          %591 = vmatprep.subr.bf16.mxu0 0
          %592 = vmatpush1.bf16.msra.mxu0 0
          %593 = vmatprep.subr.bf16.mxu0 0
          %594 = vmatpush1.bf16.msra.mxu0 0
          %595 = vmatprep.subr.bf16.mxu0 0
          %596 = vmatpush1.bf16.msra.mxu0 0
          %597 = vmatprep.subr.bf16.mxu0 0
          %598 = vmatpush1.bf16.msra.mxu0 0
          %599 = vmatprep.subr.bf16.mxu0 0
          %600 = vmatpush1.bf16.msra.mxu0 0
          %601 = vmatprep.subr.bf16.mxu0 0
          %602 = vmatpush1.bf16.msra.mxu0 0
          %603 = vmatprep.subr.bf16.mxu0 0
          %604 = vmatpush1.bf16.msra.mxu0 0
          %605 = vmatprep.subr.bf16.mxu0 0
          %606 = vmatpush1.bf16.msra.mxu0 0
          %607 = vmatprep.subr.bf16.mxu0 0
          %608 = vmatpush1.bf16.msra.mxu0 0
          %609 = vmatprep.subr.bf16.mxu0 0
          %610 = vmatpush1.bf16.msra.mxu0 0
          %611 = vmatprep.subr.bf16.mxu0 0
          %612 = vmatpush1.bf16.msra.mxu0 0
          %613 = vmatprep.subr.bf16.mxu0 0
          %614 = vmatpush1.bf16.msra.mxu0 0
          %615 = vmatprep.subr.bf16.mxu0 0
          %616 = vmatpush1.bf16.msra.mxu0 0
          %617 = vmatprep.mubr.bf16.mxu0 0
          %618 = vmatmul.mubr.bf16.gmra.mrb[0].mxu0 %v568
          %v619 = vpop.f32.mrb[0].mxu0
          %v620 = vadd.f32 %v509, %v619
          %v621 = vpop.f32.mrb[0].mxu0
          %v622 = vadd.f32 %v511, %v621
          %v623 = vpop.f32.mrb[0].mxu0
          %v624 = vadd.f32 %v513, %v623
          %v625 = vpop.f32.mrb[0].mxu0
          %v626 = vadd.f32 %v515, %v625
          %627 = vmatprep.mubr.bf16.mxu0 0
          %628 = vmatmul.mubr.bf16.gmra.mrb[0].mxu0 %v571
          %v629 = vpop.f32.mrb[0].mxu0
          %v630 = vadd.f32 %v519, %v629
          %v631 = vpop.f32.mrb[0].mxu0
          %v632 = vadd.f32 %v521, %v631
          %v633 = vpop.f32.mrb[0].mxu0
          %v634 = vadd.f32 %v523, %v633
          %v635 = vpop.f32.mrb[0].mxu0
          %v636 = vadd.f32 %v525, %v635
          %637 = vmatprep.mubr.bf16.mxu0 0
          %638 = vmatmul.mubr.bf16.gmra.mrb[0].mxu0 %v574
          %v639 = vpop.f32.mrb[0].mxu0
          %v640 = vadd.f32 %v529, %v639
          %v641 = vpop.f32.mrb[0].mxu0
          %v642 = vadd.f32 %v531, %v641
          %v643 = vpop.f32.mrb[0].mxu0
          %v644 = vadd.f32 %v533, %v643
          %v645 = vpop.f32.mrb[0].mxu0
          %v646 = vadd.f32 %v535, %v645
          %647 = vmatprep.mubr.bf16.mxu0 0
          %648 = vmatmul.mubr.bf16.gmra.mrb[0].mxu0 %v577
          %v649 = vpop.f32.mrb[0].mxu0
          %v650 = vadd.f32 %v539, %v649
          %v651 = vpop.f32.mrb[0].mxu0
          %v652 = vadd.f32 %v541, %v651
          %v653 = vpop.f32.mrb[0].mxu0
          %v654 = vadd.f32 %v543, %v653
          %v655 = vpop.f32.mrb[0].mxu0
          %v656 = vadd.f32 %v545, %v655
          %657 = vdwg.mxu0
          %s658 = scalar_lea.vmem %s1, 64
          %v659 = vld [vmem:[%s658] sm:$0xf]
          %v660 = vld [vmem:[%s658 + $0x4] sm:$0xf]
          %v661 = vld [vmem:[%s658 + $0x8] sm:$0xf]
          %v662 = vld [vmem:[%s658 + $0xc] sm:$0xf]
          %v663 = vld [vmem:[%s658 + $0x10] sm:$0xf]
          %v664 = vld [vmem:[%s658 + $0x14] sm:$0xf]
          %v665 = vld [vmem:[%s658 + $0x18] sm:$0xf]
          %v666 = vld [vmem:[%s658 + $0x1c] sm:$0xf]
          %v675 = vunpack.c.l.b16 %v659
          %v676 = vunpack.c.l.b16 %v660
          %v677 = vunpack.c.l.b16 %v661
          %v678 = vunpack.c.l.b16 %v662
          %v679 = vunpack.c.l.b16 %v663
          %v680 = vunpack.c.l.b16 %v664
          %v681 = vunpack.c.l.b16 %v665
          %v682 = vunpack.c.l.b16 %v666
          %v683 = vpack.c.b16 %v676, %v675
          %v684 = vpack.c.b16 %v678, %v677
          %v685 = vpack.c.b16 %v680, %v679
          %v686 = vpack.c.b16 %v682, %v681
          %v688 = vsel %vm454, %v683, 0
          %v691 = vsel %vm454, %v684, 0
          %v694 = vsel %vm454, %v685, 0
          %v697 = vsel %vm454, %v686, 0
          %v700 = vsel %vm467, %v411, 0
          %v703 = vsel %vm467, %v412, 0
          %705 = vmatprep.subr.bf16.mxu0 %v408
          %706 = vmatpush1.bf16.msra.mxu0 %v407
          %707 = vmatprep.subr.bf16.mxu0 %v410
          %708 = vmatpush1.bf16.msra.mxu0 %v409
          %709 = vmatprep.subr.bf16.mxu0 %v703
          %710 = vmatpush1.bf16.msra.mxu0 %v700
          %711 = vmatprep.subr.bf16.mxu0 0
          %712 = vmatpush1.bf16.msra.mxu0 0
          %713 = vmatprep.subr.bf16.mxu0 0
          %714 = vmatpush1.bf16.msra.mxu0 0
          %715 = vmatprep.subr.bf16.mxu0 0
          %716 = vmatpush1.bf16.msra.mxu0 0
          %717 = vmatprep.subr.bf16.mxu0 0
          %718 = vmatpush1.bf16.msra.mxu0 0
          %719 = vmatprep.subr.bf16.mxu0 0
          %720 = vmatpush1.bf16.msra.mxu0 0
          %721 = vmatprep.subr.bf16.mxu0 0
          %722 = vmatpush1.bf16.msra.mxu0 0
          %723 = vmatprep.subr.bf16.mxu0 0
          %724 = vmatpush1.bf16.msra.mxu0 0
          %725 = vmatprep.subr.bf16.mxu0 0
          %726 = vmatpush1.bf16.msra.mxu0 0
          %727 = vmatprep.subr.bf16.mxu0 0
          %728 = vmatpush1.bf16.msra.mxu0 0
          %729 = vmatprep.subr.bf16.mxu0 0
          %730 = vmatpush1.bf16.msra.mxu0 0
          %731 = vmatprep.subr.bf16.mxu0 0
          %732 = vmatpush1.bf16.msra.mxu0 0
          %733 = vmatprep.subr.bf16.mxu0 0
          %734 = vmatpush1.bf16.msra.mxu0 0
          %735 = vmatprep.subr.bf16.mxu0 0
          %736 = vmatpush1.bf16.msra.mxu0 0
          %737 = vmatprep.mubr.bf16.mxu0 0
          %738 = vmatmul.mubr.bf16.gmra.mrb[0].mxu0 %v688
          %v739 = vpop.f32.mrb[0].mxu0
          %v740 = vadd.f32 0.0, %v739
          %v741 = vpop.f32.mrb[0].mxu0
          %v742 = vadd.f32 0.0, %v741
          %v743 = vpop.f32.mrb[0].mxu0
          %v744 = vadd.f32 0.0, %v743
          %v745 = vpop.f32.mrb[0].mxu0
          %v746 = vadd.f32 0.0, %v745
          %747 = vmatprep.mubr.bf16.mxu0 0
          %748 = vmatmul.mubr.bf16.gmra.mrb[0].mxu0 %v691
          %v749 = vpop.f32.mrb[0].mxu0
          %v750 = vadd.f32 0.0, %v749
          %v751 = vpop.f32.mrb[0].mxu0
          %v752 = vadd.f32 0.0, %v751
          %v753 = vpop.f32.mrb[0].mxu0
          %v754 = vadd.f32 0.0, %v753
          %v755 = vpop.f32.mrb[0].mxu0
          %v756 = vadd.f32 0.0, %v755
          %757 = vmatprep.mubr.bf16.mxu0 0
          %758 = vmatmul.mubr.bf16.gmra.mrb[0].mxu0 %v694
          %v759 = vpop.f32.mrb[0].mxu0
          %v760 = vadd.f32 0.0, %v759
          %v761 = vpop.f32.mrb[0].mxu0
          %v762 = vadd.f32 0.0, %v761
          %v763 = vpop.f32.mrb[0].mxu0
          %v764 = vadd.f32 0.0, %v763
          %v765 = vpop.f32.mrb[0].mxu0
          %v766 = vadd.f32 0.0, %v765
          %767 = vmatprep.mubr.bf16.mxu0 0
          %768 = vmatmul.mubr.bf16.gmra.mrb[0].mxu0 %v697
          %v769 = vpop.f32.mrb[0].mxu0
          %v770 = vadd.f32 0.0, %v769
          %v771 = vpop.f32.mrb[0].mxu0
          %v772 = vadd.f32 0.0, %v771
          %v773 = vpop.f32.mrb[0].mxu0
          %v774 = vadd.f32 0.0, %v773
          %v775 = vpop.f32.mrb[0].mxu0
          %v776 = vadd.f32 0.0, %v775
          %777 = vdwg.mxu0
          %v778 = vadd.f32 %v620, %v740
          %v779 = vadd.f32 %v622, %v742
          %v780 = vadd.f32 %v624, %v744
          %v781 = vadd.f32 %v626, %v746
          %v782 = vadd.f32 %v630, %v750
          %v783 = vadd.f32 %v632, %v752
          %v784 = vadd.f32 %v634, %v754
          %v785 = vadd.f32 %v636, %v756
          %v786 = vadd.f32 %v640, %v760
          %v787 = vadd.f32 %v642, %v762
          %v788 = vadd.f32 %v644, %v764
          %v789 = vadd.f32 %v646, %v766
          %v790 = vadd.f32 %v650, %v770
          %v791 = vadd.f32 %v652, %v772
          %v792 = vadd.f32 %v654, %v774
          %v793 = vadd.f32 %v656, %v776
          %v794 = vld [vmem:[#allocation2] sm:$0xff]
          %v795 = vld [vmem:[#allocation2 + $0x8] sm:$0xff]
          %v796 = vld [vmem:[#allocation2 + $0x10] sm:$0xff]
          %v797 = vld [vmem:[#allocation2 + $0x18] sm:$0xff]
          %v798 = vld [vmem:[#allocation2 + $0x20] sm:$0xff]
          %v799 = vld [vmem:[#allocation2 + $0x28] sm:$0xff]
          %v800 = vld [vmem:[#allocation2 + $0x30] sm:$0xff]
          %v801 = vld [vmem:[#allocation2 + $0x38] sm:$0xff]
          %v802 = vadd.f32 %v778, %v779
          %803 = vadd.xlane.f32.xlu0 %v802
          %v804 = vpop.xlane.xlu0 %803
          %v805 = vadd.f32 %v780, %v781
          %806 = vadd.xlane.f32.xlu0 %v805
          %v807 = vpop.xlane.xlu0 %806
          %v808 = vadd.f32 %v782, %v783
          %809 = vadd.xlane.f32.xlu0 %v808
          %v810 = vpop.xlane.xlu0 %809
          %v811 = vadd.f32 %v784, %v785
          %812 = vadd.xlane.f32.xlu0 %v811
          %v813 = vpop.xlane.xlu0 %812
          %v814 = vadd.f32 %v786, %v787
          %815 = vadd.xlane.f32.xlu0 %v814
          %v816 = vpop.xlane.xlu0 %815
          %v817 = vadd.f32 %v788, %v789
          %818 = vadd.xlane.f32.xlu0 %v817
          %v819 = vpop.xlane.xlu0 %818
          %v820 = vadd.f32 %v790, %v791
          %821 = vadd.xlane.f32.xlu0 %v820
          %v822 = vpop.xlane.xlu0 %821
          %v823 = vadd.f32 %v792, %v793
          %824 = vadd.xlane.f32.xlu0 %v823
          %v825 = vpop.xlane.xlu0 %824
          %v826 = vadd.f32 %v794, %v804
          %v827 = vadd.f32 %v795, %v807
          %v828 = vadd.f32 %v796, %v810
          %v829 = vadd.f32 %v797, %v813
          %v830 = vadd.f32 %v798, %v816
          %v831 = vadd.f32 %v799, %v819
          %v832 = vadd.f32 %v800, %v822
          %v833 = vadd.f32 %v801, %v825
          %834 = vst.msk [vmem:[#allocation2] sm:$0xff] %vm298, %v826
          %835 = vst.msk [vmem:[#allocation2 + $0x8] sm:$0xff] %vm298, %v827
          %836 = vst.msk [vmem:[#allocation2 + $0x10] sm:$0xff] %vm298, %v828
          %837 = vst.msk [vmem:[#allocation2 + $0x18] sm:$0xff] %vm298, %v829
          %838 = vst.msk [vmem:[#allocation2 + $0x20] sm:$0xff] %vm298, %v830
          %839 = vst.msk [vmem:[#allocation2 + $0x28] sm:$0xff] %vm298, %v831
          %840 = vst.msk [vmem:[#allocation2 + $0x30] sm:$0xff] %vm298, %v832
          %841 = vst.msk [vmem:[#allocation2 + $0x38] sm:$0xff] %vm298, %v833
          %v842 = vld [vmem:[#allocation3] sm:$0xff]
          %v843 = vld [vmem:[#allocation3 + $0x8] sm:$0xff]
          %v844 = vld [vmem:[#allocation3 + $0x10] sm:$0xff]
          %v845 = vld [vmem:[#allocation3 + $0x18] sm:$0xff]
          %v846 = vld [vmem:[#allocation3 + $0x20] sm:$0xff]
          %v847 = vld [vmem:[#allocation3 + $0x28] sm:$0xff]
          %v848 = vld [vmem:[#allocation3 + $0x30] sm:$0xff]
          %v849 = vld [vmem:[#allocation3 + $0x38] sm:$0xff]
          %v850 = vmul.f32 %v778, %v778
          %v851 = vmul.f32 %v779, %v779
          %v852 = vmul.f32 %v780, %v780
          %v853 = vmul.f32 %v781, %v781
          %v854 = vmul.f32 %v782, %v782
          %v855 = vmul.f32 %v783, %v783
          %v856 = vmul.f32 %v784, %v784
          %v857 = vmul.f32 %v785, %v785
          %v858 = vmul.f32 %v786, %v786
          %v859 = vmul.f32 %v787, %v787
          %v860 = vmul.f32 %v788, %v788
          %v861 = vmul.f32 %v789, %v789
          %v862 = vmul.f32 %v790, %v790
          %v863 = vmul.f32 %v791, %v791
          %v864 = vmul.f32 %v792, %v792
          %v865 = vmul.f32 %v793, %v793
          %v866 = vadd.f32 %v850, %v851
          %867 = vadd.xlane.f32.xlu0 %v866
          %v868 = vpop.xlane.xlu0 %867
          %v869 = vadd.f32 %v852, %v853
          %870 = vadd.xlane.f32.xlu0 %v869
          %v871 = vpop.xlane.xlu0 %870
          %v872 = vadd.f32 %v854, %v855
          %873 = vadd.xlane.f32.xlu0 %v872
          %v874 = vpop.xlane.xlu0 %873
          %v875 = vadd.f32 %v856, %v857
          %876 = vadd.xlane.f32.xlu0 %v875
          %v877 = vpop.xlane.xlu0 %876
          %v878 = vadd.f32 %v858, %v859
          %879 = vadd.xlane.f32.xlu0 %v878
          %v880 = vpop.xlane.xlu0 %879
          %v881 = vadd.f32 %v860, %v861
          %882 = vadd.xlane.f32.xlu0 %v881
          %v883 = vpop.xlane.xlu0 %882
          %v884 = vadd.f32 %v862, %v863
          %885 = vadd.xlane.f32.xlu0 %v884
          %v886 = vpop.xlane.xlu0 %885
          %v887 = vadd.f32 %v864, %v865
          %888 = vadd.xlane.f32.xlu0 %v887
          %v889 = vpop.xlane.xlu0 %888
          %v890 = vadd.f32 %v842, %v868
          %v891 = vadd.f32 %v843, %v871
          %v892 = vadd.f32 %v844, %v874
          %v893 = vadd.f32 %v845, %v877
          %v894 = vadd.f32 %v846, %v880
          %v895 = vadd.f32 %v847, %v883
          %v896 = vadd.f32 %v848, %v886
          %v897 = vadd.f32 %v849, %v889
          %898 = vst.msk [vmem:[#allocation3] sm:$0xff] %vm298, %v890
          %899 = vst.msk [vmem:[#allocation3 + $0x8] sm:$0xff] %vm298, %v891
          %900 = vst.msk [vmem:[#allocation3 + $0x10] sm:$0xff] %vm298, %v892
          %901 = vst.msk [vmem:[#allocation3 + $0x18] sm:$0xff] %vm298, %v893
          %902 = vst.msk [vmem:[#allocation3 + $0x20] sm:$0xff] %vm298, %v894
          %903 = vst.msk [vmem:[#allocation3 + $0x28] sm:$0xff] %vm298, %v895
          %904 = vst.msk [vmem:[#allocation3 + $0x30] sm:$0xff] %vm298, %v896
          %905 = vst.msk [vmem:[#allocation3 + $0x38] sm:$0xff] %vm298, %v897
          %v906 = vpack.c.bf16 %v780, %v778
          %v907 = vpack.c.bf16 %v781, %v779
          %v908 = vpack.c.bf16 %v784, %v782
          %v909 = vpack.c.bf16 %v785, %v783
          %v910 = vpack.c.bf16 %v788, %v786
          %v911 = vpack.c.bf16 %v789, %v787
          %v912 = vpack.c.bf16 %v792, %v790
          %v913 = vpack.c.bf16 %v793, %v791
          %s914 = smul.u32 %s21, 8
          %s915 = smul.addr %s914, 8
          %s916 = scalar_lea.vmem [#allocation6], %s915
          %917 = vst [vmem:[%s916] sm:$0xff] %v906
          %918 = vst [vmem:[%s916 + $0x8] sm:$0xff] %v907
          %919 = vst [vmem:[%s916 + $0x10] sm:$0xff] %v908
          %920 = vst [vmem:[%s916 + $0x18] sm:$0xff] %v909
          %921 = vst [vmem:[%s916 + $0x20] sm:$0xff] %v910
          %922 = vst [vmem:[%s916 + $0x28] sm:$0xff] %v911
          %923 = vst [vmem:[%s916 + $0x30] sm:$0xff] %v912
          %924 = vst [vmem:[%s916 + $0x38] sm:$0xff] %v913
        $region40: #{hr_skip_forward.1} parent=31 // pred_fallthru
          _
        %p925 = scmp.eq.s32.totalorder %s20, 1
        %p926 = pnand %p925, %p228
        %p927 = pneg %p926
        // Predicated region
        $region41: #{hr_skip_forward.1} parent=31 // pred_check
          _
        $region42: #{hr_skip_forward.1} parent=31 // pred_check_branch
          %929 = sbr.rel (%p926) target = $region44
        $region43: #{hr_skip_forward.1} parent=31 // pred_region
          %v930 = vld [vmem:[#allocation2] sm:$0xff]
          %v931 = vld [vmem:[#allocation2 + $0x8] sm:$0xff]
          %v932 = vld [vmem:[#allocation2 + $0x10] sm:$0xff]
          %v933 = vld [vmem:[#allocation2 + $0x18] sm:$0xff]
          %v934 = vld [vmem:[#allocation2 + $0x20] sm:$0xff]
          %v935 = vld [vmem:[#allocation2 + $0x28] sm:$0xff]
          %v936 = vld [vmem:[#allocation2 + $0x30] sm:$0xff]
          %v937 = vld [vmem:[#allocation2 + $0x38] sm:$0xff]
          %vm938 = vcmask 7168
          %v939 = vsel %vm938, %v930, 0.0
          %v940 = vsel %vm938, %v931, 0.0
          %v941 = vadd.f32 %v939, %v940
          %v942 = vsel %vm938, %v932, 0.0
          %v943 = vadd.f32 %v941, %v942
          %v944 = vsel %vm938, %v933, 0.0
          %v945 = vadd.f32 %v943, %v944
          %v946 = vsel %vm938, %v934, 0.0
          %v947 = vadd.f32 %v945, %v946
          %v948 = vsel %vm938, %v935, 0.0
          %v949 = vadd.f32 %v947, %v948
          %v950 = vsel %vm938, %v936, 0.0
          %v951 = vadd.f32 %v949, %v950
          %v952 = vsel %vm938, %v937, 0.0
          %v953 = vadd.f32 %v951, %v952
          %v954 = vld [vmem:[#allocation3] sm:$0xff]
          %v955 = vld [vmem:[#allocation3 + $0x8] sm:$0xff]
          %v956 = vld [vmem:[#allocation3 + $0x10] sm:$0xff]
          %v957 = vld [vmem:[#allocation3 + $0x18] sm:$0xff]
          %v958 = vld [vmem:[#allocation3 + $0x20] sm:$0xff]
          %v959 = vld [vmem:[#allocation3 + $0x28] sm:$0xff]
          %v960 = vld [vmem:[#allocation3 + $0x30] sm:$0xff]
          %v961 = vld [vmem:[#allocation3 + $0x38] sm:$0xff]
          %v962 = vsel %vm938, %v954, 0.0
          %v963 = vsel %vm938, %v955, 0.0
          %v964 = vadd.f32 %v962, %v963
          %v965 = vsel %vm938, %v956, 0.0
          %v966 = vadd.f32 %v964, %v965
          %v967 = vsel %vm938, %v957, 0.0
          %v968 = vadd.f32 %v966, %v967
          %v969 = vsel %vm938, %v958, 0.0
          %v970 = vadd.f32 %v968, %v969
          %v971 = vsel %vm938, %v959, 0.0
          %v972 = vadd.f32 %v970, %v971
          %v973 = vsel %vm938, %v960, 0.0
          %v974 = vadd.f32 %v972, %v973
          %v975 = vsel %vm938, %v961, 0.0
          %v976 = vadd.f32 %v974, %v975
          %v977 = vmul.f32 %v953, 0.00024414063
          %v978 = vmul.f32 %v976, 0.00024414063
          %v979 = vmul.f32 %v977, %v977
          %v980 = vsub.f32 %v978, %v979
          %v981 = vmax.f32 %v980, 0.0
          %982 = vst.msk [vmem:[#allocation4] sm:$0xff] %vm938, %v977
          %v983 = vadd.f32 %v981, 1e-05
          %v984 = vrsqrt.pop %v983
          %985 = vst.msk [vmem:[#allocation5] sm:$0xff] %vm938, %v984
        $region44: #{hr_skip_forward.1} parent=31 // pred_fallthru
          _
        // Predicated region
        $region45: #{hr_skip_forward.1} parent=31 // pred_check
          %p986 = pneg %p925
        $region46: #{hr_skip_forward.1} parent=31 // pred_check_branch
          %988 = sbr.rel (%p986) target = $region48
        $region47: #{hr_skip_forward.1} parent=31 // pred_region
          %s989 = smul.u32 %s21, 8
          %s990 = smul.addr %s989, 8
          %s991 = scalar_lea.vmem [#allocation6], %s990
          %v992 = vld [vmem:[%s991] sm:$0xff]
          %v993 = vld [vmem:[%s991 + $0x8] sm:$0xff]
          %v994 = vld [vmem:[%s991 + $0x10] sm:$0xff]
          %v995 = vld [vmem:[%s991 + $0x18] sm:$0xff]
          %v996 = vld [vmem:[%s991 + $0x20] sm:$0xff]
          %v997 = vld [vmem:[%s991 + $0x28] sm:$0xff]
          %v998 = vld [vmem:[%s991 + $0x30] sm:$0xff]
          %v999 = vld [vmem:[%s991 + $0x38] sm:$0xff]
          %v1000 = vunpack.c.l.bf16 %v992
          %v1001 = vunpack.c.l.bf16 %v993
          %v1002 = vunpack.c.h.bf16 %v992
          %v1003 = vunpack.c.h.bf16 %v993
          %v1004 = vunpack.c.l.bf16 %v994
          %v1005 = vunpack.c.l.bf16 %v995
          %v1006 = vunpack.c.h.bf16 %v994
          %v1007 = vunpack.c.h.bf16 %v995
          %v1008 = vunpack.c.l.bf16 %v996
          %v1009 = vunpack.c.l.bf16 %v997
          %v1010 = vunpack.c.h.bf16 %v996
          %v1011 = vunpack.c.h.bf16 %v997
          %v1012 = vunpack.c.l.bf16 %v998
          %v1013 = vunpack.c.l.bf16 %v999
          %v1014 = vunpack.c.h.bf16 %v998
          %v1015 = vunpack.c.h.bf16 %v999
          %1017 = vrot.lane.b32.xlu0 %v1002, 64
          %v1018 = vpop.permute.xlu0 %1017
          %1021 = vrot.lane.b32.xlu0 %v1006, 64
          %v1022 = vpop.permute.xlu0 %1021
          %vm1024 = vcmask 523264
          %v1025 = vsel %vm1024, %v1000, %v1018
          %v1026 = vsel %vm1024, %v1004, %v1022
          %1028 = vrot.lane.b32.xlu0 %v1010, 64
          %v1029 = vpop.permute.xlu0 %1028
          %1032 = vrot.lane.b32.xlu0 %v1014, 64
          %v1033 = vpop.permute.xlu0 %1032
          %v1035 = vsel %vm1024, %v1008, %v1029
          %v1036 = vsel %vm1024, %v1012, %v1033
          %1038 = vrot.lane.b32.xlu0 %v1000, 64
          %v1039 = vpop.permute.xlu0 %1038
          %1042 = vrot.lane.b32.xlu0 %v1004, 64
          %v1043 = vpop.permute.xlu0 %1042
          %v1045 = vsel %vm1024, %v1039, %v1002
          %v1046 = vsel %vm1024, %v1043, %v1006
          %1048 = vrot.lane.b32.xlu0 %v1008, 64
          %v1049 = vpop.permute.xlu0 %1048
          %1052 = vrot.lane.b32.xlu0 %v1012, 64
          %v1053 = vpop.permute.xlu0 %1052
          %v1055 = vsel %vm1024, %v1049, %v1010
          %v1056 = vsel %vm1024, %v1053, %v1014
          %1058 = vrot.lane.b32.xlu0 %v1003, 64
          %v1059 = vpop.permute.xlu0 %1058
          %1062 = vrot.lane.b32.xlu0 %v1007, 64
          %v1063 = vpop.permute.xlu0 %1062
          %v1065 = vsel %vm1024, %v1001, %v1059
          %v1066 = vsel %vm1024, %v1005, %v1063
          %1068 = vrot.lane.b32.xlu0 %v1011, 64
          %v1069 = vpop.permute.xlu0 %1068
          %1072 = vrot.lane.b32.xlu0 %v1015, 64
          %v1073 = vpop.permute.xlu0 %1072
          %v1075 = vsel %vm1024, %v1009, %v1069
          %v1076 = vsel %vm1024, %v1013, %v1073
          %1078 = vrot.lane.b32.xlu0 %v1001, 64
          %v1079 = vpop.permute.xlu0 %1078
          %1082 = vrot.lane.b32.xlu0 %v1005, 64
          %v1083 = vpop.permute.xlu0 %1082
          %v1085 = vsel %vm1024, %v1079, %v1003
          %v1086 = vsel %vm1024, %v1083, %v1007
          %1088 = vrot.lane.b32.xlu0 %v1009, 64
          %v1089 = vpop.permute.xlu0 %1088
          %1092 = vrot.lane.b32.xlu0 %v1013, 64
          %v1093 = vpop.permute.xlu0 %1092
          %v1095 = vsel %vm1024, %v1089, %v1011
          %v1096 = vsel %vm1024, %v1093, %v1015
          %v1097 = vpack.c.bf16 %v1035, %v1025
          %v1098 = vpack.c.bf16 %v1036, %v1026
          %v1099 = vpack.c.bf16 %v1055, %v1045
          %v1100 = vpack.c.bf16 %v1056, %v1046
          %v1101 = vpack.c.bf16 %v1075, %v1065
          %v1102 = vpack.c.bf16 %v1076, %v1066
          %v1103 = vpack.c.bf16 %v1095, %v1085
          %v1104 = vpack.c.bf16 %v1096, %v1086
          %v1105 = vld [vmem:[%s2] sm:$0xff]
          %v1106 = vld [vmem:[%s2 + $0x8] sm:$0xff]
          %v1107 = vld [vmem:[%s2 + $0x10] sm:$0xff]
          %v1108 = vld [vmem:[%s2 + $0x18] sm:$0xff]
          %v1109 = vld [vmem:[%s2 + $0x20] sm:$0xff]
          %v1110 = vld [vmem:[%s2 + $0x28] sm:$0xff]
          %v1111 = vld [vmem:[%s2 + $0x30] sm:$0xff]
          %v1112 = vld [vmem:[%s2 + $0x38] sm:$0xff]
          %v1113 = vld [vmem:[%s2 + $0x40] sm:$0xff]
          %v1114 = vld [vmem:[%s2 + $0x48] sm:$0xff]
          %v1115 = vld [vmem:[%s2 + $0x50] sm:$0xff]
          %v1116 = vld [vmem:[%s2 + $0x58] sm:$0xff]
          %v1117 = vld [vmem:[%s2 + $0x60] sm:$0xff]
          %v1118 = vld [vmem:[%s2 + $0x68] sm:$0xff]
          %v1119 = vld [vmem:[%s2 + $0x70] sm:$0xff]
          %v1120 = vld [vmem:[%s2 + $0x78] sm:$0xff]
          %v1121 = vld [vmem:[%s2 + $0x80] sm:$0xff]
          %v1122 = vld [vmem:[%s2 + $0x88] sm:$0xff]
          %v1123 = vld [vmem:[%s2 + $0x90] sm:$0xff]
          %v1124 = vld [vmem:[%s2 + $0x98] sm:$0xff]
          %v1125 = vld [vmem:[%s2 + $0xa0] sm:$0xff]
          %v1126 = vld [vmem:[%s2 + $0xa8] sm:$0xff]
          %v1127 = vld [vmem:[%s2 + $0xb0] sm:$0xff]
          %v1128 = vld [vmem:[%s2 + $0xb8] sm:$0xff]
          %v1129 = vld [vmem:[%s2 + $0xc0] sm:$0xff]
          %v1130 = vld [vmem:[%s2 + $0xc8] sm:$0xff]
          %v1131 = vld [vmem:[%s2 + $0xd0] sm:$0xff]
          %v1132 = vld [vmem:[%s2 + $0xd8] sm:$0xff]
          %v1133 = vld [vmem:[%s2 + $0xe0] sm:$0xff]
          %v1134 = vld [vmem:[%s2 + $0xe8] sm:$0xff]
          %v1135 = vld [vmem:[%s2 + $0xf0] sm:$0xff]
          %v1136 = vld [vmem:[%s2 + $0xf8] sm:$0xff]
          %v1169 = vunpack.c.l.b16 %v1105
          %v1170 = vunpack.c.h.b16 %v1105
          %v1171 = vunpack.c.l.b16 %v1106
          %v1172 = vunpack.c.h.b16 %v1106
          %v1173 = vunpack.c.l.b16 %v1107
          %v1174 = vunpack.c.h.b16 %v1107
          %v1175 = vunpack.c.l.b16 %v1108
          %v1176 = vunpack.c.h.b16 %v1108
          %v1177 = vunpack.c.l.b16 %v1109
          %v1178 = vunpack.c.h.b16 %v1109
          %v1179 = vunpack.c.l.b16 %v1110
          %v1180 = vunpack.c.h.b16 %v1110
          %v1181 = vunpack.c.l.b16 %v1111
          %v1182 = vunpack.c.h.b16 %v1111
          %v1183 = vunpack.c.l.b16 %v1112
          %v1184 = vunpack.c.h.b16 %v1112
          %v1185 = vunpack.c.l.b16 %v1113
          %v1186 = vunpack.c.h.b16 %v1113
          %v1187 = vunpack.c.l.b16 %v1114
          %v1188 = vunpack.c.h.b16 %v1114
          %v1189 = vunpack.c.l.b16 %v1115
          %v1190 = vunpack.c.h.b16 %v1115
          %v1191 = vunpack.c.l.b16 %v1116
          %v1192 = vunpack.c.h.b16 %v1116
          %v1193 = vunpack.c.l.b16 %v1117
          %v1194 = vunpack.c.h.b16 %v1117
          %v1195 = vunpack.c.l.b16 %v1118
          %v1196 = vunpack.c.h.b16 %v1118
          %v1197 = vunpack.c.l.b16 %v1119
          %v1198 = vunpack.c.h.b16 %v1119
          %v1199 = vunpack.c.l.b16 %v1120
          %v1200 = vunpack.c.h.b16 %v1120
          %v1201 = vunpack.c.l.b16 %v1121
          %v1202 = vunpack.c.h.b16 %v1121
          %v1203 = vunpack.c.l.b16 %v1122
          %v1204 = vunpack.c.h.b16 %v1122
          %v1205 = vunpack.c.l.b16 %v1123
          %v1206 = vunpack.c.h.b16 %v1123
          %v1207 = vunpack.c.l.b16 %v1124
          %v1208 = vunpack.c.h.b16 %v1124
          %v1209 = vunpack.c.l.b16 %v1125
          %v1210 = vunpack.c.h.b16 %v1125
          %v1211 = vunpack.c.l.b16 %v1126
          %v1212 = vunpack.c.h.b16 %v1126
          %v1213 = vunpack.c.l.b16 %v1127
          %v1214 = vunpack.c.h.b16 %v1127
          %v1215 = vunpack.c.l.b16 %v1128
          %v1216 = vunpack.c.h.b16 %v1128
          %v1217 = vunpack.c.l.b16 %v1129
          %v1218 = vunpack.c.h.b16 %v1129
          %v1219 = vunpack.c.l.b16 %v1130
          %v1220 = vunpack.c.h.b16 %v1130
          %v1221 = vunpack.c.l.b16 %v1131
          %v1222 = vunpack.c.h.b16 %v1131
          %v1223 = vunpack.c.l.b16 %v1132
          %v1224 = vunpack.c.h.b16 %v1132
          %v1225 = vunpack.c.l.b16 %v1133
          %v1226 = vunpack.c.h.b16 %v1133
          %v1227 = vunpack.c.l.b16 %v1134
          %v1228 = vunpack.c.h.b16 %v1134
          %v1229 = vunpack.c.l.b16 %v1135
          %v1230 = vunpack.c.h.b16 %v1135
          %v1231 = vunpack.c.l.b16 %v1136
          %v1232 = vunpack.c.h.b16 %v1136
          %v1233 = vpack.c.b16 %v1171, %v1169
          %v1234 = vpack.c.b16 %v1172, %v1170
          %v1235 = vpack.c.b16 %v1175, %v1173
          %v1236 = vpack.c.b16 %v1176, %v1174
          %v1237 = vpack.c.b16 %v1179, %v1177
          %v1238 = vpack.c.b16 %v1180, %v1178
          %v1239 = vpack.c.b16 %v1183, %v1181
          %v1240 = vpack.c.b16 %v1184, %v1182
          %v1241 = vpack.c.b16 %v1187, %v1185
          %v1242 = vpack.c.b16 %v1188, %v1186
          %v1243 = vpack.c.b16 %v1191, %v1189
          %v1244 = vpack.c.b16 %v1192, %v1190
          %v1245 = vpack.c.b16 %v1195, %v1193
          %v1246 = vpack.c.b16 %v1196, %v1194
          %v1247 = vpack.c.b16 %v1199, %v1197
          %v1248 = vpack.c.b16 %v1200, %v1198
          %v1249 = vpack.c.b16 %v1203, %v1201
          %v1250 = vpack.c.b16 %v1204, %v1202
          %v1251 = vpack.c.b16 %v1207, %v1205
          %v1252 = vpack.c.b16 %v1208, %v1206
          %v1253 = vpack.c.b16 %v1211, %v1209
          %v1254 = vpack.c.b16 %v1212, %v1210
          %v1255 = vpack.c.b16 %v1215, %v1213
          %v1256 = vpack.c.b16 %v1216, %v1214
          %v1257 = vpack.c.b16 %v1219, %v1217
          %v1258 = vpack.c.b16 %v1220, %v1218
          %v1259 = vpack.c.b16 %v1223, %v1221
          %v1260 = vpack.c.b16 %v1224, %v1222
          %v1261 = vpack.c.b16 %v1227, %v1225
          %v1262 = vpack.c.b16 %v1228, %v1226
          %v1263 = vpack.c.b16 %v1231, %v1229
          %v1264 = vpack.c.b16 %v1232, %v1230
          %1297 = vmatprep.subr.bf16.mxu0 %v1234
          %1298 = vmatpush1.bf16.msra.mxu0 %v1233
          %1299 = vmatprep.subr.bf16.mxu0 %v1236
          %1300 = vmatpush1.bf16.msra.mxu0 %v1235
          %1301 = vmatprep.subr.bf16.mxu0 %v1238
          %1302 = vmatpush1.bf16.msra.mxu0 %v1237
          %1303 = vmatprep.subr.bf16.mxu0 %v1240
          %1304 = vmatpush1.bf16.msra.mxu0 %v1239
          %1305 = vmatprep.subr.bf16.mxu0 %v1242
          %1306 = vmatpush1.bf16.msra.mxu0 %v1241
          %1307 = vmatprep.subr.bf16.mxu0 %v1244
          %1308 = vmatpush1.bf16.msra.mxu0 %v1243
          %1309 = vmatprep.subr.bf16.mxu0 %v1246
          %1310 = vmatpush1.bf16.msra.mxu0 %v1245
          %1311 = vmatprep.subr.bf16.mxu0 %v1248
          %1312 = vmatpush1.bf16.msra.mxu0 %v1247
          %1313 = vmatprep.subr.bf16.mxu0 %v1250
          %1314 = vmatpush1.bf16.msra.mxu0 %v1249
          %1315 = vmatprep.subr.bf16.mxu0 %v1252
          %1316 = vmatpush1.bf16.msra.mxu0 %v1251
          %1317 = vmatprep.subr.bf16.mxu0 %v1254
          %1318 = vmatpush1.bf16.msra.mxu0 %v1253
          %1319 = vmatprep.subr.bf16.mxu0 %v1256
          %1320 = vmatpush1.bf16.msra.mxu0 %v1255
          %1321 = vmatprep.subr.bf16.mxu0 %v1258
          %1322 = vmatpush1.bf16.msra.mxu0 %v1257
          %1323 = vmatprep.subr.bf16.mxu0 %v1260
          %1324 = vmatpush1.bf16.msra.mxu0 %v1259
          %1325 = vmatprep.subr.bf16.mxu0 %v1262
          %1326 = vmatpush1.bf16.msra.mxu0 %v1261
          %1327 = vmatprep.subr.bf16.mxu0 %v1264
          %1328 = vmatpush1.bf16.msra.mxu0 %v1263
          %1329 = vmatprep.mubr.bf16.mxu0 %v1098
          %1330 = vmatmul.mubr.bf16.gmra.mrb[0].mxu0 %v1097
          %v1331 = vpop.f32.mrb[0].mxu0
          %v1332 = vadd.f32 0.0, %v1331
          %v1333 = vpop.f32.mrb[0].mxu0
          %v1334 = vadd.f32 0.0, %v1333
          %v1335 = vpop.f32.mrb[0].mxu0
          %v1336 = vadd.f32 0.0, %v1335
          %v1337 = vpop.f32.mrb[0].mxu0
          %v1338 = vadd.f32 0.0, %v1337
          %1339 = vmatprep.mubr.bf16.mxu0 %v1100
          %1340 = vmatmul.mubr.bf16.gmra.mrb[0].mxu0 %v1099
          %v1341 = vpop.f32.mrb[0].mxu0
          %v1342 = vadd.f32 0.0, %v1341
          %v1343 = vpop.f32.mrb[0].mxu0
          %v1344 = vadd.f32 0.0, %v1343
          %v1345 = vpop.f32.mrb[0].mxu0
          %v1346 = vadd.f32 0.0, %v1345
          %v1347 = vpop.f32.mrb[0].mxu0
          %v1348 = vadd.f32 0.0, %v1347
          %1349 = vmatprep.mubr.bf16.mxu0 %v1102
          %1350 = vmatmul.mubr.bf16.gmra.mrb[0].mxu0 %v1101
          %v1351 = vpop.f32.mrb[0].mxu0
          %v1352 = vadd.f32 0.0, %v1351
          %v1353 = vpop.f32.mrb[0].mxu0
          %v1354 = vadd.f32 0.0, %v1353
          %v1355 = vpop.f32.mrb[0].mxu0
          %v1356 = vadd.f32 0.0, %v1355
          %v1357 = vpop.f32.mrb[0].mxu0
          %v1358 = vadd.f32 0.0, %v1357
          %1359 = vmatprep.mubr.bf16.mxu0 %v1104
          %1360 = vmatmul.mubr.bf16.gmra.mrb[0].mxu0 %v1103
          %v1361 = vpop.f32.mrb[0].mxu0
          %v1362 = vadd.f32 0.0, %v1361
          %v1363 = vpop.f32.mrb[0].mxu0
          %v1364 = vadd.f32 0.0, %v1363
          %v1365 = vpop.f32.mrb[0].mxu0
          %v1366 = vadd.f32 0.0, %v1365
          %v1367 = vpop.f32.mrb[0].mxu0
          %v1368 = vadd.f32 0.0, %v1367
          %1369 = vdwg.mxu0
          %v1370 = vld [vmem:[#allocation4] sm:$0xff]
          %v1371 = vld [vmem:[#allocation5] sm:$0xff]
          %1373 = vset.pattern.permute.xlu0 0
          %1374 = vperm.xlu0 %1373, %v1370
          %v1375 = vpop.permute.xlu0 %1374
          %v1377 = vsub.f32 %v1332, %v1375
          %v1378 = vsub.f32 %v1334, %v1375
          %v1379 = vsub.f32 %v1336, %v1375
          %v1380 = vsub.f32 %v1338, %v1375
          %v1381 = vsub.f32 %v1342, %v1375
          %v1382 = vsub.f32 %v1344, %v1375
          %v1383 = vsub.f32 %v1346, %v1375
          %v1384 = vsub.f32 %v1348, %v1375
          %v1385 = vsub.f32 %v1352, %v1375
          %v1386 = vsub.f32 %v1354, %v1375
          %v1387 = vsub.f32 %v1356, %v1375
          %v1388 = vsub.f32 %v1358, %v1375
          %v1389 = vsub.f32 %v1362, %v1375
          %v1390 = vsub.f32 %v1364, %v1375
          %v1391 = vsub.f32 %v1366, %v1375
          %v1392 = vsub.f32 %v1368, %v1375
          %1394 = vset.pattern.permute.xlu0 0
          %1395 = vperm.xlu0 %1394, %v1371
          %v1396 = vpop.permute.xlu0 %1395
          %v1398 = vmul.f32 %v1377, %v1396
          %v1399 = vmul.f32 %v1378, %v1396
          %v1400 = vmul.f32 %v1379, %v1396
          %v1401 = vmul.f32 %v1380, %v1396
          %v1402 = vmul.f32 %v1381, %v1396
          %v1403 = vmul.f32 %v1382, %v1396
          %v1404 = vmul.f32 %v1383, %v1396
          %v1405 = vmul.f32 %v1384, %v1396
          %v1406 = vmul.f32 %v1385, %v1396
          %v1407 = vmul.f32 %v1386, %v1396
          %v1408 = vmul.f32 %v1387, %v1396
          %v1409 = vmul.f32 %v1388, %v1396
          %v1410 = vmul.f32 %v1389, %v1396
          %v1411 = vmul.f32 %v1390, %v1396
          %v1412 = vmul.f32 %v1391, %v1396
          %v1413 = vmul.f32 %v1392, %v1396
          %vm1414 = vcmp.gt.f32.partialorder %v1398, 0.0
          %vm1415 = vcmp.gt.f32.partialorder %v1399, 0.0
          %vm1416 = vcmp.gt.f32.partialorder %v1400, 0.0
          %vm1417 = vcmp.gt.f32.partialorder %v1401, 0.0
          %vm1418 = vcmp.gt.f32.partialorder %v1402, 0.0
          %vm1419 = vcmp.gt.f32.partialorder %v1403, 0.0
          %vm1420 = vcmp.gt.f32.partialorder %v1404, 0.0
          %vm1421 = vcmp.gt.f32.partialorder %v1405, 0.0
          %vm1422 = vcmp.gt.f32.partialorder %v1406, 0.0
          %vm1423 = vcmp.gt.f32.partialorder %v1407, 0.0
          %vm1424 = vcmp.gt.f32.partialorder %v1408, 0.0
          %vm1425 = vcmp.gt.f32.partialorder %v1409, 0.0
          %vm1426 = vcmp.gt.f32.partialorder %v1410, 0.0
          %vm1427 = vcmp.gt.f32.partialorder %v1411, 0.0
          %vm1428 = vcmp.gt.f32.partialorder %v1412, 0.0
          %vm1429 = vcmp.gt.f32.partialorder %v1413, 0.0
          %v1430 = vmul.f32 %v1398, 0.2
          %v1431 = vmul.f32 %v1399, 0.2
          %v1432 = vmul.f32 %v1400, 0.2
          %v1433 = vmul.f32 %v1401, 0.2
          %v1434 = vmul.f32 %v1402, 0.2
          %v1435 = vmul.f32 %v1403, 0.2
          %v1436 = vmul.f32 %v1404, 0.2
          %v1437 = vmul.f32 %v1405, 0.2
          %v1438 = vmul.f32 %v1406, 0.2
          %v1439 = vmul.f32 %v1407, 0.2
          %v1440 = vmul.f32 %v1408, 0.2
          %v1441 = vmul.f32 %v1409, 0.2
          %v1442 = vmul.f32 %v1410, 0.2
          %v1443 = vmul.f32 %v1411, 0.2
          %v1444 = vmul.f32 %v1412, 0.2
          %v1445 = vmul.f32 %v1413, 0.2
          %v1446 = vsel %vm1414, %v1398, %v1430
          %v1447 = vsel %vm1415, %v1399, %v1431
          %v1448 = vsel %vm1416, %v1400, %v1432
          %v1449 = vsel %vm1417, %v1401, %v1433
          %v1450 = vsel %vm1418, %v1402, %v1434
          %v1451 = vsel %vm1419, %v1403, %v1435
          %v1452 = vsel %vm1420, %v1404, %v1436
          %v1453 = vsel %vm1421, %v1405, %v1437
          %v1454 = vsel %vm1422, %v1406, %v1438
          %v1455 = vsel %vm1423, %v1407, %v1439
          %v1456 = vsel %vm1424, %v1408, %v1440
          %v1457 = vsel %vm1425, %v1409, %v1441
          %v1458 = vsel %vm1426, %v1410, %v1442
          %v1459 = vsel %vm1427, %v1411, %v1443
          %v1460 = vsel %vm1428, %v1412, %v1444
          %v1461 = vsel %vm1429, %v1413, %v1445
          %v1464 = vcombine.low %v1446, %v1447
          %v1465 = vcombine.high %v1446, %v1447
          %v1467 = vunpack.c.l.s4 1966171168
          %v1468 = vunpack.c.0.s8 %v1467
          %v1469 = vlaneseq
          %v1470 = vshrl.u32 %v1469, 7
          %v1471 = vsub.s32 %v1468, %v1470
          %v1472 = vrot.slane %v1464, %v1471
          %v1474 = vunpack.c.l.s4 1966171168
          %v1475 = vunpack.c.0.s8 %v1474
          %v1476 = vlaneseq
          %v1477 = vshrl.u32 %v1476, 7
          %v1478 = vsub.s32 %v1475, %v1477
          %v1479 = vrot.slane %v1465, %v1478
          %v1480 = vcombine.high %v1472, %v1472
          %v1481 = vcombine.high %v1479, %v1479
          %v1483 = vunpack.c.l.s4 1966171168
          %v1484 = vunpack.c.0.s8 %v1483
          %v1485 = vlaneseq
          %v1486 = vshrl.u32 %v1485, 7
          %v1487 = vsub.s32 %v1484, %v1486
          %v1488 = vrot.slane %v1472, %v1487
          %v1490 = vunpack.c.l.s4 1966171168
          %v1491 = vunpack.c.0.s8 %v1490
          %v1492 = vlaneseq
          %v1493 = vshrl.u32 %v1492, 7
          %v1494 = vsub.s32 %v1491, %v1493
          %v1495 = vrot.slane %v1479, %v1494
          %v1497 = vunpack.c.l.s4 1966171168
          %v1498 = vunpack.c.0.s8 %v1497
          %v1499 = vlaneseq
          %v1500 = vshrl.u32 %v1499, 7
          %v1501 = vsub.s32 %v1498, %v1500
          %v1502 = vrot.slane %v1480, %v1501
          %v1504 = vunpack.c.l.s4 1966171168
          %v1505 = vunpack.c.0.s8 %v1504
          %v1506 = vlaneseq
          %v1507 = vshrl.u32 %v1506, 7
          %v1508 = vsub.s32 %v1505, %v1507
          %v1509 = vrot.slane %v1481, %v1508
          %v1510 = vcombine.high %v1488, %v1488
          %v1511 = vcombine.high %v1495, %v1495
          %v1512 = vcombine.high %v1502, %v1502
          %v1513 = vcombine.high %v1509, %v1509
          %v1522 = vlaneseq
          %vm1523 = vcmp.ge.s32.totalorder %v1522, 0
          %vm1524 = vcmp.lt.s32.totalorder %v1522, 256
          %vm1525 = vmand %vm1523, %vm1524
          %1526 = vst.msk [vmem:[%s207] ss:$8 sm:$0x3] %vm1525, %v1488
          %1527 = vst.msk [vmem:[%s207] ss:$8 sm:$0x0] %vm1525, %v1488
          %s1528 = scalar_lea.vmem %s207, 16 [#allocation7]
          %1529 = vst.msk [vmem:[%s1528] ss:$8 sm:$0x3] %vm1525, %v1502
          %1530 = vst.msk [vmem:[%s1528] ss:$8 sm:$0x0] %vm1525, %v1502
          %s1531 = scalar_lea.vmem %s207, 32 [#allocation7]
          %1532 = vst.msk [vmem:[%s1531] ss:$8 sm:$0x3] %vm1525, %v1510
          %1533 = vst.msk [vmem:[%s1531] ss:$8 sm:$0x0] %vm1525, %v1510
          %s1534 = scalar_lea.vmem %s207, 48 [#allocation7]
          %1535 = vst.msk [vmem:[%s1534] ss:$8 sm:$0x3] %vm1525, %v1512
          %1536 = vst.msk [vmem:[%s1534] ss:$8 sm:$0x0] %vm1525, %v1512
          %s1537 = scalar_lea.vmem %s207, 64 [#allocation7]
          %1538 = vst.msk [vmem:[%s1537] ss:$8 sm:$0x3] %vm1525, %v1495
          %1539 = vst.msk [vmem:[%s1537] ss:$8 sm:$0x0] %vm1525, %v1495
          %s1540 = scalar_lea.vmem %s207, 80 [#allocation7]
          %1541 = vst.msk [vmem:[%s1540] ss:$8 sm:$0x3] %vm1525, %v1509
          %1542 = vst.msk [vmem:[%s1540] ss:$8 sm:$0x0] %vm1525, %v1509
          %s1543 = scalar_lea.vmem %s207, 96 [#allocation7]
          %1544 = vst.msk [vmem:[%s1543] ss:$8 sm:$0x3] %vm1525, %v1511
          %1545 = vst.msk [vmem:[%s1543] ss:$8 sm:$0x0] %vm1525, %v1511
          %s1546 = scalar_lea.vmem %s207, 112 [#allocation7]
          %1547 = vst.msk [vmem:[%s1546] ss:$8 sm:$0x3] %vm1525, %v1513
          %1548 = vst.msk [vmem:[%s1546] ss:$8 sm:$0x0] %vm1525, %v1513
          %v1551 = vcombine.low %v1448, %v1449
          %v1552 = vcombine.high %v1448, %v1449
          %v1554 = vunpack.c.l.s4 1966171168
          %v1555 = vunpack.c.0.s8 %v1554
          %v1556 = vlaneseq
          %v1557 = vshrl.u32 %v1556, 7
          %v1558 = vsub.s32 %v1555, %v1557
          %v1559 = vrot.slane %v1551, %v1558
          %v1561 = vunpack.c.l.s4 1966171168
          %v1562 = vunpack.c.0.s8 %v1561
          %v1563 = vlaneseq
          %v1564 = vshrl.u32 %v1563, 7
          %v1565 = vsub.s32 %v1562, %v1564
          %v1566 = vrot.slane %v1552, %v1565
          %v1567 = vcombine.high %v1559, %v1559
          %v1568 = vcombine.high %v1566, %v1566
          %v1570 = vunpack.c.l.s4 1966171168
          %v1571 = vunpack.c.0.s8 %v1570
          %v1572 = vlaneseq
          %v1573 = vshrl.u32 %v1572, 7
          %v1574 = vsub.s32 %v1571, %v1573
          %v1575 = vrot.slane %v1559, %v1574
          %v1577 = vunpack.c.l.s4 1966171168
          %v1578 = vunpack.c.0.s8 %v1577
          %v1579 = vlaneseq
          %v1580 = vshrl.u32 %v1579, 7
          %v1581 = vsub.s32 %v1578, %v1580
          %v1582 = vrot.slane %v1566, %v1581
          %v1584 = vunpack.c.l.s4 1966171168
          %v1585 = vunpack.c.0.s8 %v1584
          %v1586 = vlaneseq
          %v1587 = vshrl.u32 %v1586, 7
          %v1588 = vsub.s32 %v1585, %v1587
          %v1589 = vrot.slane %v1567, %v1588
          %v1591 = vunpack.c.l.s4 1966171168
          %v1592 = vunpack.c.0.s8 %v1591
          %v1593 = vlaneseq
          %v1594 = vshrl.u32 %v1593, 7
          %v1595 = vsub.s32 %v1592, %v1594
          %v1596 = vrot.slane %v1568, %v1595
          %v1597 = vcombine.high %v1575, %v1575
          %v1598 = vcombine.high %v1582, %v1582
          %v1599 = vcombine.high %v1589, %v1589
          %v1600 = vcombine.high %v1596, %v1596
          %s1609 = scalar_lea.vmem %s207, 1 [#allocation7]
          %1610 = vst.msk [vmem:[%s1609] ss:$8 sm:$0x3] %vm1525, %v1575
          %1611 = vst.msk [vmem:[%s1609] ss:$8 sm:$0x0] %vm1525, %v1575
          %s1612 = scalar_lea.vmem %s207, 17 [#allocation7]
          %1613 = vst.msk [vmem:[%s1612] ss:$8 sm:$0x3] %vm1525, %v1589
          %1614 = vst.msk [vmem:[%s1612] ss:$8 sm:$0x0] %vm1525, %v1589
          %s1615 = scalar_lea.vmem %s207, 33 [#allocation7]
          %1616 = vst.msk [vmem:[%s1615] ss:$8 sm:$0x3] %vm1525, %v1597
          %1617 = vst.msk [vmem:[%s1615] ss:$8 sm:$0x0] %vm1525, %v1597
          %s1618 = scalar_lea.vmem %s207, 49 [#allocation7]
          %1619 = vst.msk [vmem:[%s1618] ss:$8 sm:$0x3] %vm1525, %v1599
          %1620 = vst.msk [vmem:[%s1618] ss:$8 sm:$0x0] %vm1525, %v1599
          %s1621 = scalar_lea.vmem %s207, 65 [#allocation7]
          %1622 = vst.msk [vmem:[%s1621] ss:$8 sm:$0x3] %vm1525, %v1582
          %1623 = vst.msk [vmem:[%s1621] ss:$8 sm:$0x0] %vm1525, %v1582
          %s1624 = scalar_lea.vmem %s207, 81 [#allocation7]
          %1625 = vst.msk [vmem:[%s1624] ss:$8 sm:$0x3] %vm1525, %v1596
          %1626 = vst.msk [vmem:[%s1624] ss:$8 sm:$0x0] %vm1525, %v1596
          %s1627 = scalar_lea.vmem %s207, 97 [#allocation7]
          %1628 = vst.msk [vmem:[%s1627] ss:$8 sm:$0x3] %vm1525, %v1598
          %1629 = vst.msk [vmem:[%s1627] ss:$8 sm:$0x0] %vm1525, %v1598
          %s1630 = scalar_lea.vmem %s207, 113 [#allocation7]
          %1631 = vst.msk [vmem:[%s1630] ss:$8 sm:$0x3] %vm1525, %v1600
          %1632 = vst.msk [vmem:[%s1630] ss:$8 sm:$0x0] %vm1525, %v1600
          %v1635 = vcombine.low %v1450, %v1451
          %v1636 = vcombine.high %v1450, %v1451
          %v1638 = vunpack.c.l.s4 1966171168
          %v1639 = vunpack.c.0.s8 %v1638
          %v1640 = vlaneseq
          %v1641 = vshrl.u32 %v1640, 7
          %v1642 = vsub.s32 %v1639, %v1641
          %v1643 = vrot.slane %v1635, %v1642
          %v1645 = vunpack.c.l.s4 1966171168
          %v1646 = vunpack.c.0.s8 %v1645
          %v1647 = vlaneseq
          %v1648 = vshrl.u32 %v1647, 7
          %v1649 = vsub.s32 %v1646, %v1648
          %v1650 = vrot.slane %v1636, %v1649
          %v1651 = vcombine.high %v1643, %v1643
          %v1652 = vcombine.high %v1650, %v1650
          %v1654 = vunpack.c.l.s4 1966171168
          %v1655 = vunpack.c.0.s8 %v1654
          %v1656 = vlaneseq
          %v1657 = vshrl.u32 %v1656, 7
          %v1658 = vsub.s32 %v1655, %v1657
          %v1659 = vrot.slane %v1643, %v1658
          %v1661 = vunpack.c.l.s4 1966171168
          %v1662 = vunpack.c.0.s8 %v1661
          %v1663 = vlaneseq
          %v1664 = vshrl.u32 %v1663, 7
          %v1665 = vsub.s32 %v1662, %v1664
          %v1666 = vrot.slane %v1650, %v1665
          %v1668 = vunpack.c.l.s4 1966171168
          %v1669 = vunpack.c.0.s8 %v1668
          %v1670 = vlaneseq
          %v1671 = vshrl.u32 %v1670, 7
          %v1672 = vsub.s32 %v1669, %v1671
          %v1673 = vrot.slane %v1651, %v1672
          %v1675 = vunpack.c.l.s4 1966171168
          %v1676 = vunpack.c.0.s8 %v1675
          %v1677 = vlaneseq
          %v1678 = vshrl.u32 %v1677, 7
          %v1679 = vsub.s32 %v1676, %v1678
          %v1680 = vrot.slane %v1652, %v1679
          %v1681 = vcombine.high %v1659, %v1659
          %v1682 = vcombine.high %v1666, %v1666
          %v1683 = vcombine.high %v1673, %v1673
          %v1684 = vcombine.high %v1680, %v1680
          %s1693 = scalar_lea.vmem %s207, 2 [#allocation7]
          %1694 = vst.msk [vmem:[%s1693] ss:$8 sm:$0x3] %vm1525, %v1659
          %1695 = vst.msk [vmem:[%s1693] ss:$8 sm:$0x0] %vm1525, %v1659
          %s1696 = scalar_lea.vmem %s207, 18 [#allocation7]
          %1697 = vst.msk [vmem:[%s1696] ss:$8 sm:$0x3] %vm1525, %v1673
          %1698 = vst.msk [vmem:[%s1696] ss:$8 sm:$0x0] %vm1525, %v1673
          %s1699 = scalar_lea.vmem %s207, 34 [#allocation7]
          %1700 = vst.msk [vmem:[%s1699] ss:$8 sm:$0x3] %vm1525, %v1681
          %1701 = vst.msk [vmem:[%s1699] ss:$8 sm:$0x0] %vm1525, %v1681
          %s1702 = scalar_lea.vmem %s207, 50 [#allocation7]
          %1703 = vst.msk [vmem:[%s1702] ss:$8 sm:$0x3] %vm1525, %v1683
          %1704 = vst.msk [vmem:[%s1702] ss:$8 sm:$0x0] %vm1525, %v1683
          %s1705 = scalar_lea.vmem %s207, 66 [#allocation7]
          %1706 = vst.msk [vmem:[%s1705] ss:$8 sm:$0x3] %vm1525, %v1666
          %1707 = vst.msk [vmem:[%s1705] ss:$8 sm:$0x0] %vm1525, %v1666
          %s1708 = scalar_lea.vmem %s207, 82 [#allocation7]
          %1709 = vst.msk [vmem:[%s1708] ss:$8 sm:$0x3] %vm1525, %v1680
          %1710 = vst.msk [vmem:[%s1708] ss:$8 sm:$0x0] %vm1525, %v1680
          %s1711 = scalar_lea.vmem %s207, 98 [#allocation7]
          %1712 = vst.msk [vmem:[%s1711] ss:$8 sm:$0x3] %vm1525, %v1682
          %1713 = vst.msk [vmem:[%s1711] ss:$8 sm:$0x0] %vm1525, %v1682
          %s1714 = scalar_lea.vmem %s207, 114 [#allocation7]
          %1715 = vst.msk [vmem:[%s1714] ss:$8 sm:$0x3] %vm1525, %v1684
          %1716 = vst.msk [vmem:[%s1714] ss:$8 sm:$0x0] %vm1525, %v1684
          %v1719 = vcombine.low %v1452, %v1453
          %v1720 = vcombine.high %v1452, %v1453
          %v1722 = vunpack.c.l.s4 1966171168
          %v1723 = vunpack.c.0.s8 %v1722
          %v1724 = vlaneseq
          %v1725 = vshrl.u32 %v1724, 7
          %v1726 = vsub.s32 %v1723, %v1725
          %v1727 = vrot.slane %v1719, %v1726
          %v1729 = vunpack.c.l.s4 1966171168
          %v1730 = vunpack.c.0.s8 %v1729
          %v1731 = vlaneseq
          %v1732 = vshrl.u32 %v1731, 7
          %v1733 = vsub.s32 %v1730, %v1732
          %v1734 = vrot.slane %v1720, %v1733
          %v1735 = vcombine.high %v1727, %v1727
          %v1736 = vcombine.high %v1734, %v1734
          %v1738 = vunpack.c.l.s4 1966171168
          %v1739 = vunpack.c.0.s8 %v1738
          %v1740 = vlaneseq
          %v1741 = vshrl.u32 %v1740, 7
          %v1742 = vsub.s32 %v1739, %v1741
          %v1743 = vrot.slane %v1727, %v1742
          %v1745 = vunpack.c.l.s4 1966171168
          %v1746 = vunpack.c.0.s8 %v1745
          %v1747 = vlaneseq
          %v1748 = vshrl.u32 %v1747, 7
          %v1749 = vsub.s32 %v1746, %v1748
          %v1750 = vrot.slane %v1734, %v1749
          %v1752 = vunpack.c.l.s4 1966171168
          %v1753 = vunpack.c.0.s8 %v1752
          %v1754 = vlaneseq
          %v1755 = vshrl.u32 %v1754, 7
          %v1756 = vsub.s32 %v1753, %v1755
          %v1757 = vrot.slane %v1735, %v1756
          %v1759 = vunpack.c.l.s4 1966171168
          %v1760 = vunpack.c.0.s8 %v1759
          %v1761 = vlaneseq
          %v1762 = vshrl.u32 %v1761, 7
          %v1763 = vsub.s32 %v1760, %v1762
          %v1764 = vrot.slane %v1736, %v1763
          %v1765 = vcombine.high %v1743, %v1743
          %v1766 = vcombine.high %v1750, %v1750
          %v1767 = vcombine.high %v1757, %v1757
          %v1768 = vcombine.high %v1764, %v1764
          %s1777 = scalar_lea.vmem %s207, 3 [#allocation7]
          %1778 = vst.msk [vmem:[%s1777] ss:$8 sm:$0x3] %vm1525, %v1743
          %1779 = vst.msk [vmem:[%s1777] ss:$8 sm:$0x0] %vm1525, %v1743
          %s1780 = scalar_lea.vmem %s207, 19 [#allocation7]
          %1781 = vst.msk [vmem:[%s1780] ss:$8 sm:$0x3] %vm1525, %v1757
          %1782 = vst.msk [vmem:[%s1780] ss:$8 sm:$0x0] %vm1525, %v1757
          %s1783 = scalar_lea.vmem %s207, 35 [#allocation7]
          %1784 = vst.msk [vmem:[%s1783] ss:$8 sm:$0x3] %vm1525, %v1765
          %1785 = vst.msk [vmem:[%s1783] ss:$8 sm:$0x0] %vm1525, %v1765
          %s1786 = scalar_lea.vmem %s207, 51 [#allocation7]
          %1787 = vst.msk [vmem:[%s1786] ss:$8 sm:$0x3] %vm1525, %v1767
          %1788 = vst.msk [vmem:[%s1786] ss:$8 sm:$0x0] %vm1525, %v1767
          %s1789 = scalar_lea.vmem %s207, 67 [#allocation7]
          %1790 = vst.msk [vmem:[%s1789] ss:$8 sm:$0x3] %vm1525, %v1750
          %1791 = vst.msk [vmem:[%s1789] ss:$8 sm:$0x0] %vm1525, %v1750
          %s1792 = scalar_lea.vmem %s207, 83 [#allocation7]
          %1793 = vst.msk [vmem:[%s1792] ss:$8 sm:$0x3] %vm1525, %v1764
          %1794 = vst.msk [vmem:[%s1792] ss:$8 sm:$0x0] %vm1525, %v1764
          %s1795 = scalar_lea.vmem %s207, 99 [#allocation7]
          %1796 = vst.msk [vmem:[%s1795] ss:$8 sm:$0x3] %vm1525, %v1766
          %1797 = vst.msk [vmem:[%s1795] ss:$8 sm:$0x0] %vm1525, %v1766
          %s1798 = scalar_lea.vmem %s207, 115 [#allocation7]
          %1799 = vst.msk [vmem:[%s1798] ss:$8 sm:$0x3] %vm1525, %v1768
          %1800 = vst.msk [vmem:[%s1798] ss:$8 sm:$0x0] %vm1525, %v1768
          %v1803 = vcombine.low %v1454, %v1455
          %v1804 = vcombine.high %v1454, %v1455
          %v1806 = vunpack.c.l.s4 1966171168
          %v1807 = vunpack.c.0.s8 %v1806
          %v1808 = vlaneseq
          %v1809 = vshrl.u32 %v1808, 7
          %v1810 = vsub.s32 %v1807, %v1809
          %v1811 = vrot.slane %v1803, %v1810
          %v1813 = vunpack.c.l.s4 1966171168
          %v1814 = vunpack.c.0.s8 %v1813
          %v1815 = vlaneseq
          %v1816 = vshrl.u32 %v1815, 7
          %v1817 = vsub.s32 %v1814, %v1816
          %v1818 = vrot.slane %v1804, %v1817
          %v1819 = vcombine.high %v1811, %v1811
          %v1820 = vcombine.high %v1818, %v1818
          %v1822 = vunpack.c.l.s4 1966171168
          %v1823 = vunpack.c.0.s8 %v1822
          %v1824 = vlaneseq
          %v1825 = vshrl.u32 %v1824, 7
          %v1826 = vsub.s32 %v1823, %v1825
          %v1827 = vrot.slane %v1811, %v1826
          %v1829 = vunpack.c.l.s4 1966171168
          %v1830 = vunpack.c.0.s8 %v1829
          %v1831 = vlaneseq
          %v1832 = vshrl.u32 %v1831, 7
          %v1833 = vsub.s32 %v1830, %v1832
          %v1834 = vrot.slane %v1818, %v1833
          %v1836 = vunpack.c.l.s4 1966171168
          %v1837 = vunpack.c.0.s8 %v1836
          %v1838 = vlaneseq
          %v1839 = vshrl.u32 %v1838, 7
          %v1840 = vsub.s32 %v1837, %v1839
          %v1841 = vrot.slane %v1819, %v1840
          %v1843 = vunpack.c.l.s4 1966171168
          %v1844 = vunpack.c.0.s8 %v1843
          %v1845 = vlaneseq
          %v1846 = vshrl.u32 %v1845, 7
          %v1847 = vsub.s32 %v1844, %v1846
          %v1848 = vrot.slane %v1820, %v1847
          %v1849 = vcombine.high %v1827, %v1827
          %v1850 = vcombine.high %v1834, %v1834
          %v1851 = vcombine.high %v1841, %v1841
          %v1852 = vcombine.high %v1848, %v1848
          %s1861 = scalar_lea.vmem %s207, 4 [#allocation7]
          %1862 = vst.msk [vmem:[%s1861] ss:$8 sm:$0x3] %vm1525, %v1827
          %1863 = vst.msk [vmem:[%s1861] ss:$8 sm:$0x0] %vm1525, %v1827
          %s1864 = scalar_lea.vmem %s207, 20 [#allocation7]
          %1865 = vst.msk [vmem:[%s1864] ss:$8 sm:$0x3] %vm1525, %v1841
          %1866 = vst.msk [vmem:[%s1864] ss:$8 sm:$0x0] %vm1525, %v1841
          %s1867 = scalar_lea.vmem %s207, 36 [#allocation7]
          %1868 = vst.msk [vmem:[%s1867] ss:$8 sm:$0x3] %vm1525, %v1849
          %1869 = vst.msk [vmem:[%s1867] ss:$8 sm:$0x0] %vm1525, %v1849
          %s1870 = scalar_lea.vmem %s207, 52 [#allocation7]
          %1871 = vst.msk [vmem:[%s1870] ss:$8 sm:$0x3] %vm1525, %v1851
          %1872 = vst.msk [vmem:[%s1870] ss:$8 sm:$0x0] %vm1525, %v1851
          %s1873 = scalar_lea.vmem %s207, 68 [#allocation7]
          %1874 = vst.msk [vmem:[%s1873] ss:$8 sm:$0x3] %vm1525, %v1834
          %1875 = vst.msk [vmem:[%s1873] ss:$8 sm:$0x0] %vm1525, %v1834
          %s1876 = scalar_lea.vmem %s207, 84 [#allocation7]
          %1877 = vst.msk [vmem:[%s1876] ss:$8 sm:$0x3] %vm1525, %v1848
          %1878 = vst.msk [vmem:[%s1876] ss:$8 sm:$0x0] %vm1525, %v1848
          %s1879 = scalar_lea.vmem %s207, 100 [#allocation7]
          %1880 = vst.msk [vmem:[%s1879] ss:$8 sm:$0x3] %vm1525, %v1850
          %1881 = vst.msk [vmem:[%s1879] ss:$8 sm:$0x0] %vm1525, %v1850
          %s1882 = scalar_lea.vmem %s207, 116 [#allocation7]
          %1883 = vst.msk [vmem:[%s1882] ss:$8 sm:$0x3] %vm1525, %v1852
          %1884 = vst.msk [vmem:[%s1882] ss:$8 sm:$0x0] %vm1525, %v1852
          %v1887 = vcombine.low %v1456, %v1457
          %v1888 = vcombine.high %v1456, %v1457
          %v1890 = vunpack.c.l.s4 1966171168
          %v1891 = vunpack.c.0.s8 %v1890
          %v1892 = vlaneseq
          %v1893 = vshrl.u32 %v1892, 7
          %v1894 = vsub.s32 %v1891, %v1893
          %v1895 = vrot.slane %v1887, %v1894
          %v1897 = vunpack.c.l.s4 1966171168
          %v1898 = vunpack.c.0.s8 %v1897
          %v1899 = vlaneseq
          %v1900 = vshrl.u32 %v1899, 7
          %v1901 = vsub.s32 %v1898, %v1900
          %v1902 = vrot.slane %v1888, %v1901
          %v1903 = vcombine.high %v1895, %v1895
          %v1904 = vcombine.high %v1902, %v1902
          %v1906 = vunpack.c.l.s4 1966171168
          %v1907 = vunpack.c.0.s8 %v1906
          %v1908 = vlaneseq
          %v1909 = vshrl.u32 %v1908, 7
          %v1910 = vsub.s32 %v1907, %v1909
          %v1911 = vrot.slane %v1895, %v1910
          %v1913 = vunpack.c.l.s4 1966171168
          %v1914 = vunpack.c.0.s8 %v1913
          %v1915 = vlaneseq
          %v1916 = vshrl.u32 %v1915, 7
          %v1917 = vsub.s32 %v1914, %v1916
          %v1918 = vrot.slane %v1902, %v1917
          %v1920 = vunpack.c.l.s4 1966171168
          %v1921 = vunpack.c.0.s8 %v1920
          %v1922 = vlaneseq
          %v1923 = vshrl.u32 %v1922, 7
          %v1924 = vsub.s32 %v1921, %v1923
          %v1925 = vrot.slane %v1903, %v1924
          %v1927 = vunpack.c.l.s4 1966171168
          %v1928 = vunpack.c.0.s8 %v1927
          %v1929 = vlaneseq
          %v1930 = vshrl.u32 %v1929, 7
          %v1931 = vsub.s32 %v1928, %v1930
          %v1932 = vrot.slane %v1904, %v1931
          %v1933 = vcombine.high %v1911, %v1911
          %v1934 = vcombine.high %v1918, %v1918
          %v1935 = vcombine.high %v1925, %v1925
          %v1936 = vcombine.high %v1932, %v1932
          %s1945 = scalar_lea.vmem %s207, 5 [#allocation7]
          %1946 = vst.msk [vmem:[%s1945] ss:$8 sm:$0x3] %vm1525, %v1911
          %1947 = vst.msk [vmem:[%s1945] ss:$8 sm:$0x0] %vm1525, %v1911
          %s1948 = scalar_lea.vmem %s207, 21 [#allocation7]
          %1949 = vst.msk [vmem:[%s1948] ss:$8 sm:$0x3] %vm1525, %v1925
          %1950 = vst.msk [vmem:[%s1948] ss:$8 sm:$0x0] %vm1525, %v1925
          %s1951 = scalar_lea.vmem %s207, 37 [#allocation7]
          %1952 = vst.msk [vmem:[%s1951] ss:$8 sm:$0x3] %vm1525, %v1933
          %1953 = vst.msk [vmem:[%s1951] ss:$8 sm:$0x0] %vm1525, %v1933
          %s1954 = scalar_lea.vmem %s207, 53 [#allocation7]
          %1955 = vst.msk [vmem:[%s1954] ss:$8 sm:$0x3] %vm1525, %v1935
          %1956 = vst.msk [vmem:[%s1954] ss:$8 sm:$0x0] %vm1525, %v1935
          %s1957 = scalar_lea.vmem %s207, 69 [#allocation7]
          %1958 = vst.msk [vmem:[%s1957] ss:$8 sm:$0x3] %vm1525, %v1918
          %1959 = vst.msk [vmem:[%s1957] ss:$8 sm:$0x0] %vm1525, %v1918
          %s1960 = scalar_lea.vmem %s207, 85 [#allocation7]
          %1961 = vst.msk [vmem:[%s1960] ss:$8 sm:$0x3] %vm1525, %v1932
          %1962 = vst.msk [vmem:[%s1960] ss:$8 sm:$0x0] %vm1525, %v1932
          %s1963 = scalar_lea.vmem %s207, 101 [#allocation7]
          %1964 = vst.msk [vmem:[%s1963] ss:$8 sm:$0x3] %vm1525, %v1934
          %1965 = vst.msk [vmem:[%s1963] ss:$8 sm:$0x0] %vm1525, %v1934
          %s1966 = scalar_lea.vmem %s207, 117 [#allocation7]
          %1967 = vst.msk [vmem:[%s1966] ss:$8 sm:$0x3] %vm1525, %v1936
          %1968 = vst.msk [vmem:[%s1966] ss:$8 sm:$0x0] %vm1525, %v1936
          %v1971 = vcombine.low %v1458, %v1459
          %v1972 = vcombine.high %v1458, %v1459
          %v1974 = vunpack.c.l.s4 1966171168
          %v1975 = vunpack.c.0.s8 %v1974
          %v1976 = vlaneseq
          %v1977 = vshrl.u32 %v1976, 7
          %v1978 = vsub.s32 %v1975, %v1977
          %v1979 = vrot.slane %v1971, %v1978
          %v1981 = vunpack.c.l.s4 1966171168
          %v1982 = vunpack.c.0.s8 %v1981
          %v1983 = vlaneseq
          %v1984 = vshrl.u32 %v1983, 7
          %v1985 = vsub.s32 %v1982, %v1984
          %v1986 = vrot.slane %v1972, %v1985
          %v1987 = vcombine.high %v1979, %v1979
          %v1988 = vcombine.high %v1986, %v1986
          %v1990 = vunpack.c.l.s4 1966171168
          %v1991 = vunpack.c.0.s8 %v1990
          %v1992 = vlaneseq
          %v1993 = vshrl.u32 %v1992, 7
          %v1994 = vsub.s32 %v1991, %v1993
          %v1995 = vrot.slane %v1979, %v1994
          %v1997 = vunpack.c.l.s4 1966171168
          %v1998 = vunpack.c.0.s8 %v1997
          %v1999 = vlaneseq
          %v2000 = vshrl.u32 %v1999, 7
          %v2001 = vsub.s32 %v1998, %v2000
          %v2002 = vrot.slane %v1986, %v2001
          %v2004 = vunpack.c.l.s4 1966171168
          %v2005 = vunpack.c.0.s8 %v2004
          %v2006 = vlaneseq
          %v2007 = vshrl.u32 %v2006, 7
          %v2008 = vsub.s32 %v2005, %v2007
          %v2009 = vrot.slane %v1987, %v2008
          %v2011 = vunpack.c.l.s4 1966171168
          %v2012 = vunpack.c.0.s8 %v2011
          %v2013 = vlaneseq
          %v2014 = vshrl.u32 %v2013, 7
          %v2015 = vsub.s32 %v2012, %v2014
          %v2016 = vrot.slane %v1988, %v2015
          %v2017 = vcombine.high %v1995, %v1995
          %v2018 = vcombine.high %v2002, %v2002
          %v2019 = vcombine.high %v2009, %v2009
          %v2020 = vcombine.high %v2016, %v2016
          %s2029 = scalar_lea.vmem %s207, 6 [#allocation7]
          %2030 = vst.msk [vmem:[%s2029] ss:$8 sm:$0x3] %vm1525, %v1995
          %2031 = vst.msk [vmem:[%s2029] ss:$8 sm:$0x0] %vm1525, %v1995
          %s2032 = scalar_lea.vmem %s207, 22 [#allocation7]
          %2033 = vst.msk [vmem:[%s2032] ss:$8 sm:$0x3] %vm1525, %v2009
          %2034 = vst.msk [vmem:[%s2032] ss:$8 sm:$0x0] %vm1525, %v2009
          %s2035 = scalar_lea.vmem %s207, 38 [#allocation7]
          %2036 = vst.msk [vmem:[%s2035] ss:$8 sm:$0x3] %vm1525, %v2017
          %2037 = vst.msk [vmem:[%s2035] ss:$8 sm:$0x0] %vm1525, %v2017
          %s2038 = scalar_lea.vmem %s207, 54 [#allocation7]
          %2039 = vst.msk [vmem:[%s2038] ss:$8 sm:$0x3] %vm1525, %v2019
          %2040 = vst.msk [vmem:[%s2038] ss:$8 sm:$0x0] %vm1525, %v2019
          %s2041 = scalar_lea.vmem %s207, 70 [#allocation7]
          %2042 = vst.msk [vmem:[%s2041] ss:$8 sm:$0x3] %vm1525, %v2002
          %2043 = vst.msk [vmem:[%s2041] ss:$8 sm:$0x0] %vm1525, %v2002
          %s2044 = scalar_lea.vmem %s207, 86 [#allocation7]
          %2045 = vst.msk [vmem:[%s2044] ss:$8 sm:$0x3] %vm1525, %v2016
          %2046 = vst.msk [vmem:[%s2044] ss:$8 sm:$0x0] %vm1525, %v2016
          %s2047 = scalar_lea.vmem %s207, 102 [#allocation7]
          %2048 = vst.msk [vmem:[%s2047] ss:$8 sm:$0x3] %vm1525, %v2018
          %2049 = vst.msk [vmem:[%s2047] ss:$8 sm:$0x0] %vm1525, %v2018
          %s2050 = scalar_lea.vmem %s207, 118 [#allocation7]
          %2051 = vst.msk [vmem:[%s2050] ss:$8 sm:$0x3] %vm1525, %v2020
          %2052 = vst.msk [vmem:[%s2050] ss:$8 sm:$0x0] %vm1525, %v2020
          %v2055 = vcombine.low %v1460, %v1461
          %v2056 = vcombine.high %v1460, %v1461
          %v2058 = vunpack.c.l.s4 1966171168
          %v2059 = vunpack.c.0.s8 %v2058
          %v2060 = vlaneseq
          %v2061 = vshrl.u32 %v2060, 7
          %v2062 = vsub.s32 %v2059, %v2061
          %v2063 = vrot.slane %v2055, %v2062
          %v2065 = vunpack.c.l.s4 1966171168
          %v2066 = vunpack.c.0.s8 %v2065
          %v2067 = vlaneseq
          %v2068 = vshrl.u32 %v2067, 7
          %v2069 = vsub.s32 %v2066, %v2068
          %v2070 = vrot.slane %v2056, %v2069
          %v2071 = vcombine.high %v2063, %v2063
          %v2072 = vcombine.high %v2070, %v2070
          %v2074 = vunpack.c.l.s4 1966171168
          %v2075 = vunpack.c.0.s8 %v2074
          %v2076 = vlaneseq
          %v2077 = vshrl.u32 %v2076, 7
          %v2078 = vsub.s32 %v2075, %v2077
          %v2079 = vrot.slane %v2063, %v2078
          %v2081 = vunpack.c.l.s4 1966171168
          %v2082 = vunpack.c.0.s8 %v2081
          %v2083 = vlaneseq
          %v2084 = vshrl.u32 %v2083, 7
          %v2085 = vsub.s32 %v2082, %v2084
          %v2086 = vrot.slane %v2070, %v2085
          %v2088 = vunpack.c.l.s4 1966171168
          %v2089 = vunpack.c.0.s8 %v2088
          %v2090 = vlaneseq
          %v2091 = vshrl.u32 %v2090, 7
          %v2092 = vsub.s32 %v2089, %v2091
          %v2093 = vrot.slane %v2071, %v2092
          %v2095 = vunpack.c.l.s4 1966171168
          %v2096 = vunpack.c.0.s8 %v2095
          %v2097 = vlaneseq
          %v2098 = vshrl.u32 %v2097, 7
          %v2099 = vsub.s32 %v2096, %v2098
          %v2100 = vrot.slane %v2072, %v2099
          %v2101 = vcombine.high %v2079, %v2079
          %v2102 = vcombine.high %v2086, %v2086
          %v2103 = vcombine.high %v2093, %v2093
          %v2104 = vcombine.high %v2100, %v2100
          %s2113 = scalar_lea.vmem %s207, 7 [#allocation7]
          %2114 = vst.msk [vmem:[%s2113] ss:$8 sm:$0x3] %vm1525, %v2079
          %2115 = vst.msk [vmem:[%s2113] ss:$8 sm:$0x0] %vm1525, %v2079
          %s2116 = scalar_lea.vmem %s207, 23 [#allocation7]
          %2117 = vst.msk [vmem:[%s2116] ss:$8 sm:$0x3] %vm1525, %v2093
          %2118 = vst.msk [vmem:[%s2116] ss:$8 sm:$0x0] %vm1525, %v2093
          %s2119 = scalar_lea.vmem %s207, 39 [#allocation7]
          %2120 = vst.msk [vmem:[%s2119] ss:$8 sm:$0x3] %vm1525, %v2101
          %2121 = vst.msk [vmem:[%s2119] ss:$8 sm:$0x0] %vm1525, %v2101
          %s2122 = scalar_lea.vmem %s207, 55 [#allocation7]
          %2123 = vst.msk [vmem:[%s2122] ss:$8 sm:$0x3] %vm1525, %v2103
          %2124 = vst.msk [vmem:[%s2122] ss:$8 sm:$0x0] %vm1525, %v2103
          %s2125 = scalar_lea.vmem %s207, 71 [#allocation7]
          %2126 = vst.msk [vmem:[%s2125] ss:$8 sm:$0x3] %vm1525, %v2086
          %2127 = vst.msk [vmem:[%s2125] ss:$8 sm:$0x0] %vm1525, %v2086
          %s2128 = scalar_lea.vmem %s207, 87 [#allocation7]
          %2129 = vst.msk [vmem:[%s2128] ss:$8 sm:$0x3] %vm1525, %v2100
          %2130 = vst.msk [vmem:[%s2128] ss:$8 sm:$0x0] %vm1525, %v2100
          %s2131 = scalar_lea.vmem %s207, 103 [#allocation7]
          %2132 = vst.msk [vmem:[%s2131] ss:$8 sm:$0x3] %vm1525, %v2102
          %2133 = vst.msk [vmem:[%s2131] ss:$8 sm:$0x0] %vm1525, %v2102
          %s2134 = scalar_lea.vmem %s207, 119 [#allocation7]
          %2135 = vst.msk [vmem:[%s2134] ss:$8 sm:$0x3] %vm1525, %v2104
          %2136 = vst.msk [vmem:[%s2134] ss:$8 sm:$0x0] %vm1525, %v2104
        $region48: #{hr_skip_forward.1} parent=31 // pred_fallthru
          _
        %s2137 = sand.u32 %s121, 1
        %s2138 = sand.u32 %s121, 1
        %s2139 = smul.addr %s2138, 128
        %s2140 = scalar_lea.vmem [#allocation7], %s2139
        // Predicated region
        $region49: #{hr_skip_forward.1} parent=31 // pred_check
          %p2141 = pneg %p131
        $region50: #{hr_skip_forward.1} parent=31 // pred_check_branch
          %2143 = sbr.rel (%p2141) target = $region52
        $region51: #{hr_skip_forward.1} parent=31 // pred_region
          %s2144 = smul.u32 %s21, %s20
          %s2145 = smul.addr %s2144, 2
          %s2146 = smul.addr %s19, 32
          %s2147 = sadd.s32 %s2145, %s2146
          %s2148 = smul.addr %s2147, 8
          %s2149 = scalar_lea.vmem %s3, %s2148
          // Predicated region
          $region53: #{hr_skip_forward.1} parent=51 // pred_check
            _
          $region54: #{hr_skip_forward.1} parent=51 // pred_check_branch
            %2151 = sbr.rel (0) target = $region56
          $region55: #{hr_skip_forward.1} parent=51 // pred_region
            // Predicated region
            $region57: #{hr_skip_forward.1} parent=55 // pred_check
              _
            $region58: #{hr_skip_forward.1} parent=55 // pred_check_branch
              %2153 = sbr.rel (0) target = $region60
            $region59: #{hr_skip_forward.1} parent=55 // pred_region
              loop: start=0, step=1, limit=1
              $region61: #{hr_skip_forward.1} parent=59 // loop_pre_header
                _
              $region62: #{hr_skip_forward.1} parent=59 // loop_header
                %s2155 = sphi 0, %s2159
                %p2156 = scmp.ge.s32.totalorder %s2155, 1
                %s2160 = sphi %s2140, %s2140
                %s2161 = sphi %s2149, %s2149
              $region63: #{hr_skip_forward.1} parent=59 // loop_header_branch
                %2158 = sbr.rel (%p2156) target = $region67
              $region64: #{hr_skip_forward.1} parent=59 // loop_body
                %v2162 = vld [vmem:[%s2160] sm:$0xff]
                %2163 = vst [vmem:[%s2161] sm:$0xff] %v2162
                %v2164 = vld [vmem:[%s2160 + $0x8] sm:$0xff]
                %2165 = vst [vmem:[%s2161 + $0x8] sm:$0xff] %v2164
                %v2166 = vld [vmem:[%s2160 + $0x10] sm:$0xff]
                %2167 = vst [vmem:[%s2161 + $0x20] sm:$0xff] %v2166
                %v2168 = vld [vmem:[%s2160 + $0x18] sm:$0xff]
                %2169 = vst [vmem:[%s2161 + $0x28] sm:$0xff] %v2168
                %v2170 = vld [vmem:[%s2160 + $0x20] sm:$0xff]
                %2171 = vst [vmem:[%s2161 + $0x40] sm:$0xff] %v2170
                %v2172 = vld [vmem:[%s2160 + $0x28] sm:$0xff]
                %2173 = vst [vmem:[%s2161 + $0x48] sm:$0xff] %v2172
                %v2174 = vld [vmem:[%s2160 + $0x30] sm:$0xff]
                %2175 = vst [vmem:[%s2161 + $0x60] sm:$0xff] %v2174
                %v2176 = vld [vmem:[%s2160 + $0x38] sm:$0xff]
                %2177 = vst [vmem:[%s2161 + $0x68] sm:$0xff] %v2176
                %v2178 = vld [vmem:[%s2160 + $0x40] sm:$0xff]
                %2179 = vst [vmem:[%s2161 + $0x80] sm:$0xff] %v2178
                %v2180 = vld [vmem:[%s2160 + $0x48] sm:$0xff]
                %2181 = vst [vmem:[%s2161 + $0x88] sm:$0xff] %v2180
                %v2182 = vld [vmem:[%s2160 + $0x50] sm:$0xff]
                %2183 = vst [vmem:[%s2161 + $0xa0] sm:$0xff] %v2182
                %v2184 = vld [vmem:[%s2160 + $0x58] sm:$0xff]
                %2185 = vst [vmem:[%s2161 + $0xa8] sm:$0xff] %v2184
                %v2186 = vld [vmem:[%s2160 + $0x60] sm:$0xff]
                %2187 = vst [vmem:[%s2161 + $0xc0] sm:$0xff] %v2186
                %v2188 = vld [vmem:[%s2160 + $0x68] sm:$0xff]
                %2189 = vst [vmem:[%s2161 + $0xc8] sm:$0xff] %v2188
                %v2190 = vld [vmem:[%s2160 + $0x70] sm:$0xff]
                %2191 = vst [vmem:[%s2161 + $0xe0] sm:$0xff] %v2190
                %v2192 = vld [vmem:[%s2160 + $0x78] sm:$0xff]
                %2193 = vst [vmem:[%s2161 + $0xe8] sm:$0xff] %v2192
              $region65: #{hr_skip_forward.1} parent=59 // loop_footer
                %s2159 = sadd.s32 1, %s2155
              $region66: #{hr_skip_forward.1} parent=59 // loop_footer_branch
                %2154 = sbr.rel target = $region62
              $region67: #{hr_skip_forward.1} parent=59 // loop_exit
                _
            $region60: #{hr_skip_forward.1} parent=55 // pred_fallthru
              _
            // Predicated region
            $region68: #{hr_skip_forward.1} parent=55 // pred_check
              _
            $region69: #{hr_skip_forward.1} parent=55 // pred_check_branch
              %2195 = sbr.rel target = $region71
            $region70: #{hr_skip_forward.1} parent=55 // pred_region
              _
            $region71: #{hr_skip_forward.1} parent=55 // pred_fallthru
              _
          $region56: #{hr_skip_forward.1} parent=51 // pred_fallthru
            _
          %2196 = vnop
        $region52: #{hr_skip_forward.1} parent=31 // pred_fallthru
          _
      $region32: #{hr_skip_forward.1} parent=5 // pred_fallthru
        _
      %p2197 = scmp.le.s32.totalorder 2, %s9
      // Predicated region
      $region72: #{hr_skip_forward.1} parent=5 // pred_check
        %p2198 = pneg %p2197
      $region73: #{hr_skip_forward.1} parent=5 // pred_check_branch
        %2200 = sbr.rel (%p2198) target = $region75
      $region74: #{hr_skip_forward.1} parent=5 // pred_region
        %s2201 = ssub.s32 %s9, 2
        // Predicated region
        $region76: #{hr_skip_forward.1} parent=74 // pred_check
          %p2202 = pneg %p137
        $region77: #{hr_skip_forward.1} parent=74 // pred_check_branch
          %2204 = sbr.rel (%p2202) target = $region79
        $region78: #{hr_skip_forward.1} parent=74 // pred_region
          %s2205 = sand.u32 %s122, 1
          %s2206 = sand.u32 %s122, 1
          %s2207 = smul.addr %s2206, 128
          %s2208 = scalar_lea.vmem [#allocation7], %s2207
        $region79: #{hr_skip_forward.1} parent=74 // pred_fallthru
          _
      $region75: #{hr_skip_forward.1} parent=5 // pred_fallthru
        _
    $region6: #{hr_skip_forward.1} parent=1 // loop_footer
      %s13 = sadd.s32 1, %s9
    $region7: #{hr_skip_forward.1} parent=1 // loop_footer_branch
      %8 = sbr.rel target = $region3
    $region8: #{hr_skip_forward.1} parent=1 // loop_exit
      _

</llo_original>
